<compile_context>
chip_gen: v6e
topology: v6e:2x2x1
jax: 0.10.0
libtpu: 0.0.40
codegen_flags: <defaults>
</compile_context>

<pallas_src>
import jax
import jax.numpy as jnp
from jax import lax
from jax.experimental import pallas as pl
from jax.experimental.pallas import tpu as pltpu


N_GROUPS = 32   # GroupNorm32
GN_EPS = 1e-5   # PyTorch nn.GroupNorm default eps


def make_attention_block_kernel(n_heads: int, d_k: int, n_groups: int,
                                eps: float, scale: float):
    def kernel(x_ref, gnw_ref, gnb_ref, gmat_ref,
               wq_ref, wk_ref, wv_ref, bq_ref, bk_ref, bv_ref,
               wo_ref, bo_ref, out_ref):
        xb = x_ref[...]                                  # (HW, C) f32
        hw, c = xb.shape
        cg = c // n_groups
        inv_n = 1.0 / float(hw * cg)

        # ---------------- GroupNorm(32, C) ----------------
        gmat = gmat_ref[...]                             # (C, G) one-hot groups
        s1 = jnp.sum(xb, axis=0, keepdims=True)          # (1, C)
        s2 = jnp.sum(xb * xb, axis=0, keepdims=True)     # (1, C)
        gs1 = jnp.dot(s1, gmat, preferred_element_type=jnp.float32)   # (1, G)
        gs2 = jnp.dot(s2, gmat, preferred_element_type=jnp.float32)   # (1, G)
        mean_g = gs1 * inv_n
        var_g = gs2 * inv_n - mean_g * mean_g
        inv_g = lax.rsqrt(var_g + eps)
        # scatter group stats back to per-channel vectors (contract group axis)
        dn = (((1,), (1,)), ((), ()))
        mean_c = lax.dot_general(mean_g, gmat, dn,
                                 preferred_element_type=jnp.float32)  # (1, C)
        inv_c = lax.dot_general(inv_g, gmat, dn,
                                preferred_element_type=jnp.float32)   # (1, C)
        hn = (xb - mean_c) * inv_c * gnw_ref[...] + gnb_ref[...]      # (HW, C)

        # ---------------- multi-head self-attention ----------------
        acc = jnp.zeros((hw, c), jnp.float32)
        for h in range(n_heads):                         # static unroll, small
            qh = (jnp.dot(hn, wq_ref[h], preferred_element_type=jnp.float32)
                  + bq_ref[h]) * scale                   # (HW, d_k)
            kh = jnp.dot(hn, wk_ref[h],
                         preferred_element_type=jnp.float32) + bk_ref[h]
            vh = jnp.dot(hn, wv_ref[h],
                         preferred_element_type=jnp.float32) + bv_ref[h]
            # scores[i, j] = q_i . k_j   (contract d_k, no explicit transpose)
            scores = lax.dot_general(qh, kh, (((1,), (1,)), ((), ())),
                                     preferred_element_type=jnp.float32)  # (HW, HW)
            m = jnp.max(scores, axis=1, keepdims=True)
            p = jnp.exp(scores - m)
            denom = jnp.sum(p, axis=1, keepdims=True)
            attn = p * pl.reciprocal(denom, approx=True)
            oh = jnp.dot(attn, vh, preferred_element_type=jnp.float32)   # (HW, d_k)
            acc = acc + jnp.dot(oh, wo_ref[h],
                                preferred_element_type=jnp.float32)      # (HW, C)

        out_ref[...] = (acc + bo_ref[...] + xb).astype(out_ref.dtype)

    return kernel


def prepare_attention_params(gn_w, gn_b, w_proj, b_proj, w_out, b_out,
                             n_channels, n_heads, d_k, n_groups=N_GROUPS):
    """One-time parameter re-layout (hoisted out of the per-call hot path).

    PyTorch layouts:
      gn_w/gn_b: (C,)          w_proj: (3*H*d_k, C)   b_proj: (3*H*d_k,)
      w_out:     (C, H*d_k)    b_out:  (C,)
    """
    c = n_channels
    cg = c // n_groups
    w4 = w_proj.reshape(n_heads, 3, d_k, c)              # (H, 3, d_k, C)
    wq = jnp.transpose(w4[:, 0], (0, 2, 1))              # (H, C, d_k)
    wk = jnp.transpose(w4[:, 1], (0, 2, 1))
    wv = jnp.transpose(w4[:, 2], (0, 2, 1))
    b3 = b_proj.reshape(n_heads, 3, d_k)
    bq = b3[:, 0].reshape(n_heads, 1, d_k)
    bk = b3[:, 1].reshape(n_heads, 1, d_k)
    bv = b3[:, 2].reshape(n_heads, 1, d_k)
    wo = jnp.transpose(w_out).reshape(n_heads, d_k, c)   # (H, d_k, C)
    bo = b_out.reshape(1, c)
    gnw = gn_w.reshape(1, c)
    gnb = gn_b.reshape(1, c)
    group = jnp.arange(c, dtype=jnp.int32) // cg
    gmat = (group[:, None] == jnp.arange(n_groups, dtype=jnp.int32)[None, :]
            ).astype(jnp.float32)                        # (C, G)
    return dict(gnw=gnw, gnb=gnb, gmat=gmat, wq=wq, wk=wk, wv=wv,
                bq=bq, bk=bk, bv=bv, wo=wo, bo=bo)


def attention_block_pallas(x, params, *, n_heads, d_k, n_groups=N_GROUPS):
    b, c, hgt, wid = x.shape
    hw = hgt * wid
    scale = d_k ** -0.5

    # lane-dense (B, HW, C): channels on the 128-lane axis, spatial on sublanes
    x_seq = jnp.transpose(x.reshape(b, c, hw), (0, 2, 1)).astype(jnp.float32)

    kernel = make_attention_block_kernel(n_heads, d_k, n_groups, GN_EPS, scale)

    out_seq = pl.pallas_call(
        kernel,
        out_shape=jax.ShapeDtypeStruct((b, hw, c), jnp.float32),
        grid=(b,),
        in_specs=[
            pl.BlockSpec((None, hw, c), lambda i: (i, 0, 0)),        # x (per image)
            pl.BlockSpec((1, c), lambda i: (0, 0)),                  # gn weight
            pl.BlockSpec((1, c), lambda i: (0, 0)),                  # gn bias
            pl.BlockSpec((c, n_groups), lambda i: (0, 0)),           # group matrix
            pl.BlockSpec((n_heads, c, d_k), lambda i: (0, 0, 0)),    # wq
            pl.BlockSpec((n_heads, c, d_k), lambda i: (0, 0, 0)),    # wk
            pl.BlockSpec((n_heads, c, d_k), lambda i: (0, 0, 0)),    # wv
            pl.BlockSpec((n_heads, 1, d_k), lambda i: (0, 0, 0)),    # bq
            pl.BlockSpec((n_heads, 1, d_k), lambda i: (0, 0, 0)),    # bk
            pl.BlockSpec((n_heads, 1, d_k), lambda i: (0, 0, 0)),    # bv
            pl.BlockSpec((n_heads, d_k, c), lambda i: (0, 0, 0)),    # wo
            pl.BlockSpec((1, c), lambda i: (0, 0)),                  # bo
        ],
        out_specs=pl.BlockSpec((None, hw, c), lambda i: (i, 0, 0)),
        compiler_params=pltpu.CompilerParams(
            dimension_semantics=("parallel",)),
    )(x_seq, params["gnw"], params["gnb"], params["gmat"],
      params["wq"], params["wk"], params["wv"],
      params["bq"], params["bk"], params["bv"],
      params["wo"], params["bo"])

    return jnp.transpose(out_seq, (0, 2, 1)).reshape(b, c, hgt, wid)


def attention_block_ref(x, gn_w, gn_b, w_proj, b_proj, w_out, b_out,
                        n_heads, d_k, n_groups=N_GROUPS, eps=GN_EPS):
    """Plain-JAX reference mirroring the PyTorch forward."""
    b, c, hgt, wid = x.shape
    hw = hgt * wid
    xg = x.reshape(b, n_groups, c // n_groups, hgt, wid)
    mean = xg.mean(axis=(2, 3, 4), keepdims=True)
    var = xg.var(axis=(2, 3, 4), keepdims=True)
    xn = (xg - mean) / jnp.sqrt(var + eps)
    xn = xn.reshape(b, c, hgt, wid) * gn_w[None, :, None, None] \
        + gn_b[None, :, None, None]
    h = jnp.transpose(xn.reshape(b, c, hw), (0, 2, 1))              # (B, HW, C)
    qkv = h @ w_proj.T + b_proj
    qkv = qkv.reshape(b, hw, n_heads, 3 * d_k)
    q, k, v = jnp.split(qkv, 3, axis=-1)
    attn = jnp.einsum('bihd,bjhd->bijh', q, k) * (d_k ** -0.5)
    attn = jax.nn.softmax(attn, axis=2)
    res = jnp.einsum('bijh,bjhd->bihd', attn, v)
    res = res.reshape(b, hw, n_heads * d_k)
    res = res @ w_out.T + b_out
    res = jnp.transpose(res, (0, 2, 1)).reshape(b, c, hgt, wid)
    return res + x


if __name__ == "__main__":
    B, C, H, W = 2, 64, 8, 8          # C must be a multiple of 32 (GroupNorm32)
    n_heads, d_k = 2, 32

    key = jax.random.PRNGKey(0)
    ks = jax.random.split(key, 7)
    x = jax.random.normal(ks[0], (B, C, H, W), jnp.float32)
    gn_w = 1.0 + 0.1 * jax.random.normal(ks[1], (C,), jnp.float32)
    gn_b = 0.1 * jax.random.normal(ks[2], (C,), jnp.float32)
    w_proj = 0.05 * jax.random.normal(ks[3], (3 * n_heads * d_k, C), jnp.float32)
    b_proj = 0.05 * jax.random.normal(ks[4], (3 * n_heads * d_k,), jnp.float32)
    w_out = 0.05 * jax.random.normal(ks[5], (C, n_heads * d_k), jnp.float32)
    b_out = 0.05 * jax.random.normal(ks[6], (C,), jnp.float32)

    # Parameter re-layout happens ONCE, outside the hot path.
    params = prepare_attention_params(gn_w, gn_b, w_proj, b_proj, w_out, b_out,
                                      C, n_heads, d_k)

    out = attention_block_pallas(x, params, n_heads=n_heads, d_k=d_k)
    out = jax.block_until_ready(out)

    ref = attention_block_ref(x, gn_w, gn_b, w_proj, b_proj, w_out, b_out,
                              n_heads, d_k)
    assert out.shape == (B, C, H, W)
    err = jnp.max(jnp.abs(out - ref))
    assert jnp.allclose(out, ref, atol=2e-3, rtol=2e-3), f"max abs err {err}"

    print("KERNEL_OK")
</pallas_src>

<mosaic_0001>
module attributes {stable_mosaic.version = 11 : i64} {
  func.func @kernel(%arg0: i32, %arg1: memref<1x64x64xf32, #tpu.memory_space<vmem>>, %arg2: memref<1x64xf32, #tpu.memory_space<vmem>>, %arg3: memref<1x64xf32, #tpu.memory_space<vmem>>, %arg4: memref<64x32xf32, #tpu.memory_space<vmem>>, %arg5: memref<2x64x32xf32, #tpu.memory_space<vmem>>, %arg6: memref<2x64x32xf32, #tpu.memory_space<vmem>>, %arg7: memref<2x64x32xf32, #tpu.memory_space<vmem>>, %arg8: memref<2x1x32xf32, #tpu.memory_space<vmem>>, %arg9: memref<2x1x32xf32, #tpu.memory_space<vmem>>, %arg10: memref<2x1x32xf32, #tpu.memory_space<vmem>>, %arg11: memref<2x32x64xf32, #tpu.memory_space<vmem>>, %arg12: memref<1x64xf32, #tpu.memory_space<vmem>>, %arg13: memref<1x64x64xf32, #tpu.memory_space<vmem>>) attributes {dimension_semantics = [#tpu.dimension_semantics<parallel>], iteration_bounds = array<i64: 2>, scalar_prefetch = 0 : i64, scratch_operands = 0 : i64, tpu.core_type = #tpu.core_type<tc>, window_params = [{transform_indices = @transform_0, window_bounds = array<i64: 1, 64, 64>}, {pipeline_mode = #tpu.pipeline_mode<synchronous>, transform_indices = @transform_1, window_bounds = array<i64: 1, 64>}, {pipeline_mode = #tpu.pipeline_mode<synchronous>, transform_indices = @transform_2, window_bounds = array<i64: 1, 64>}, {pipeline_mode = #tpu.pipeline_mode<synchronous>, transform_indices = @transform_3, window_bounds = array<i64: 64, 32>}, {pipeline_mode = #tpu.pipeline_mode<synchronous>, transform_indices = @transform_4, window_bounds = array<i64: 2, 64, 32>}, {pipeline_mode = #tpu.pipeline_mode<synchronous>, transform_indices = @transform_5, window_bounds = array<i64: 2, 64, 32>}, {pipeline_mode = #tpu.pipeline_mode<synchronous>, transform_indices = @transform_6, window_bounds = array<i64: 2, 64, 32>}, {pipeline_mode = #tpu.pipeline_mode<synchronous>, transform_indices = @transform_7, window_bounds = array<i64: 2, 1, 32>}, {pipeline_mode = #tpu.pipeline_mode<synchronous>, transform_indices = @transform_8, window_bounds = array<i64: 2, 1, 32>}, {pipeline_mode = #tpu.pipeline_mode<synchronous>, transform_indices = @transform_9, window_bounds = array<i64: 2, 1, 32>}, {pipeline_mode = #tpu.pipeline_mode<synchronous>, transform_indices = @transform_10, window_bounds = array<i64: 2, 32, 64>}, {pipeline_mode = #tpu.pipeline_mode<synchronous>, transform_indices = @transform_11, window_bounds = array<i64: 1, 64>}, {transform_indices = @transform_12, window_bounds = array<i64: 1, 64, 64>}]} {
    %c0 = arith.constant 0 : index
    %c0_0 = arith.constant 0 : index
    %c0_1 = arith.constant 0 : index
    %0 = vector.load %arg1[%c0, %c0_0, %c0_1] : memref<1x64x64xf32, #tpu.memory_space<vmem>>, vector<1x64x64xf32>
    %1 = vector.shape_cast %0 : vector<1x64x64xf32> to vector<64x64xf32>
    %c0_2 = arith.constant 0 : index
    %c0_3 = arith.constant 0 : index
    %2 = vector.load %arg4[%c0_2, %c0_3] : memref<64x32xf32, #tpu.memory_space<vmem>>, vector<64x32xf32>
    %cst = arith.constant dense<0.000000e+00> : vector<64xf32>
    %3 = vector.multi_reduction <add>, %1, %cst [0] : vector<64x64xf32> to vector<64xf32>
    %4 = vector.shape_cast %3 : vector<64xf32> to vector<1x64xf32>
    %5 = arith.mulf %1, %1 : vector<64x64xf32>
    %cst_4 = arith.constant dense<0.000000e+00> : vector<64xf32>
    %6 = vector.multi_reduction <add>, %5, %cst_4 [0] : vector<64x64xf32> to vector<64xf32>
    %7 = vector.shape_cast %6 : vector<64xf32> to vector<1x64xf32>
    %cst_5 = arith.constant dense<0.000000e+00> : vector<1x32xf32>
    %8 = tpu.matmul %4, %2, %cst_5 {dimension_numbers = #tpu.dot_dimension_numbers<[1], [0], [0], [1], [0, 0, 1, 1], [], []>} : vector<1x64xf32>, vector<64x32xf32>, vector<1x32xf32> -> vector<1x32xf32>
    %cst_6 = arith.constant dense<0.000000e+00> : vector<1x32xf32>
    %9 = tpu.matmul %7, %2, %cst_6 {dimension_numbers = #tpu.dot_dimension_numbers<[1], [0], [0], [1], [0, 0, 1, 1], [], []>} : vector<1x64xf32>, vector<64x32xf32>, vector<1x32xf32> -> vector<1x32xf32>
    %cst_7 = arith.constant 7.812500e-03 : f32
    %10 = vector.broadcast %cst_7 : f32 to vector<1x32xf32>
    %11 = arith.mulf %8, %10 : vector<1x32xf32>
    %cst_8 = arith.constant 7.812500e-03 : f32
    %12 = vector.broadcast %cst_8 : f32 to vector<1x32xf32>
    %13 = arith.mulf %9, %12 : vector<1x32xf32>
    %14 = arith.mulf %11, %11 : vector<1x32xf32>
    %15 = arith.subf %13, %14 : vector<1x32xf32>
    %cst_9 = arith.constant 9.99999974E-6 : f32
    %16 = vector.broadcast %cst_9 : f32 to vector<1x32xf32>
    %17 = arith.addf %15, %16 : vector<1x32xf32>
    %18 = math.rsqrt %17 : vector<1x32xf32>
    %cst_10 = arith.constant dense<0.000000e+00> : vector<1x64xf32>
    %19 = tpu.matmul %11, %2, %cst_10 {dimension_numbers = #tpu.dot_dimension_numbers<[1], [1], [0], [0], [0, 0, 1, 0], [], []>} : vector<1x32xf32>, vector<64x32xf32>, vector<1x64xf32> -> vector<1x64xf32>
    %cst_11 = arith.constant dense<0.000000e+00> : vector<1x64xf32>
    %20 = tpu.matmul %18, %2, %cst_11 {dimension_numbers = #tpu.dot_dimension_numbers<[1], [1], [0], [0], [0, 0, 1, 0], [], []>} : vector<1x32xf32>, vector<64x32xf32>, vector<1x64xf32> -> vector<1x64xf32>
    %21 = vector.broadcast %19 : vector<1x64xf32> to vector<64x64xf32>
    %22 = arith.subf %1, %21 : vector<64x64xf32>
    %23 = vector.broadcast %20 : vector<1x64xf32> to vector<64x64xf32>
    %24 = arith.mulf %22, %23 : vector<64x64xf32>
    %c0_12 = arith.constant 0 : index
    %c0_13 = arith.constant 0 : index
    %25 = vector.load %arg2[%c0_12, %c0_13] : memref<1x64xf32, #tpu.memory_space<vmem>>, vector<1x64xf32>
    %26 = vector.broadcast %25 : vector<1x64xf32> to vector<64x64xf32>
    %27 = arith.mulf %24, %26 : vector<64x64xf32>
    %c0_14 = arith.constant 0 : index
    %c0_15 = arith.constant 0 : index
    %28 = vector.load %arg3[%c0_14, %c0_15] : memref<1x64xf32, #tpu.memory_space<vmem>>, vector<1x64xf32>
    %29 = vector.broadcast %28 : vector<1x64xf32> to vector<64x64xf32>
    %30 = arith.addf %27, %29 : vector<64x64xf32>
    %cst_16 = arith.constant 0.000000e+00 : f32
    %31 = vector.broadcast %cst_16 : f32 to vector<64x64xf32>
    %c0_17 = arith.constant 0 : index
    %c0_18 = arith.constant 0 : index
    %c0_19 = arith.constant 0 : index
    %32 = vector.load %arg5[%c0_17, %c0_18, %c0_19] : memref<2x64x32xf32, #tpu.memory_space<vmem>>, vector<1x64x32xf32>
    %33 = vector.shape_cast %32 : vector<1x64x32xf32> to vector<64x32xf32>
    %cst_20 = arith.constant dense<0.000000e+00> : vector<64x32xf32>
    %34 = tpu.matmul %30, %33, %cst_20 {dimension_numbers = #tpu.dot_dimension_numbers<[1], [0], [0], [1], [0, 0, 1, 1], [], []>} : vector<64x64xf32>, vector<64x32xf32>, vector<64x32xf32> -> vector<64x32xf32>
    %c0_21 = arith.constant 0 : index
    %c0_22 = arith.constant 0 : index
    %c0_23 = arith.constant 0 : index
    %35 = vector.load %arg8[%c0_21, %c0_22, %c0_23] : memref<2x1x32xf32, #tpu.memory_space<vmem>>, vector<1x1x32xf32>
    %36 = vector.shape_cast %35 : vector<1x1x32xf32> to vector<1x32xf32>
    %37 = vector.broadcast %36 : vector<1x32xf32> to vector<64x32xf32>
    %38 = arith.addf %34, %37 : vector<64x32xf32>
    %cst_24 = arith.constant 0.176776692 : f32
    %39 = vector.broadcast %cst_24 : f32 to vector<64x32xf32>
    %40 = arith.mulf %38, %39 : vector<64x32xf32>
    %c0_25 = arith.constant 0 : index
    %c0_26 = arith.constant 0 : index
    %c0_27 = arith.constant 0 : index
    %41 = vector.load %arg6[%c0_25, %c0_26, %c0_27] : memref<2x64x32xf32, #tpu.memory_space<vmem>>, vector<1x64x32xf32>
    %42 = vector.shape_cast %41 : vector<1x64x32xf32> to vector<64x32xf32>
    %cst_28 = arith.constant dense<0.000000e+00> : vector<64x32xf32>
    %43 = tpu.matmul %30, %42, %cst_28 {dimension_numbers = #tpu.dot_dimension_numbers<[1], [0], [0], [1], [0, 0, 1, 1], [], []>} : vector<64x64xf32>, vector<64x32xf32>, vector<64x32xf32> -> vector<64x32xf32>
    %c0_29 = arith.constant 0 : index
    %c0_30 = arith.constant 0 : index
    %c0_31 = arith.constant 0 : index
    %44 = vector.load %arg9[%c0_29, %c0_30, %c0_31] : memref<2x1x32xf32, #tpu.memory_space<vmem>>, vector<1x1x32xf32>
    %45 = vector.shape_cast %44 : vector<1x1x32xf32> to vector<1x32xf32>
    %46 = vector.broadcast %45 : vector<1x32xf32> to vector<64x32xf32>
    %47 = arith.addf %43, %46 : vector<64x32xf32>
    %c0_32 = arith.constant 0 : index
    %c0_33 = arith.constant 0 : index
    %c0_34 = arith.constant 0 : index
    %48 = vector.load %arg7[%c0_32, %c0_33, %c0_34] : memref<2x64x32xf32, #tpu.memory_space<vmem>>, vector<1x64x32xf32>
    %49 = vector.shape_cast %48 : vector<1x64x32xf32> to vector<64x32xf32>
    %cst_35 = arith.constant dense<0.000000e+00> : vector<64x32xf32>
    %50 = tpu.matmul %30, %49, %cst_35 {dimension_numbers = #tpu.dot_dimension_numbers<[1], [0], [0], [1], [0, 0, 1, 1], [], []>} : vector<64x64xf32>, vector<64x32xf32>, vector<64x32xf32> -> vector<64x32xf32>
    %c0_36 = arith.constant 0 : index
    %c0_37 = arith.constant 0 : index
    %c0_38 = arith.constant 0 : index
    %51 = vector.load %arg10[%c0_36, %c0_37, %c0_38] : memref<2x1x32xf32, #tpu.memory_space<vmem>>, vector<1x1x32xf32>
    %52 = vector.shape_cast %51 : vector<1x1x32xf32> to vector<1x32xf32>
    %53 = vector.broadcast %52 : vector<1x32xf32> to vector<64x32xf32>
    %54 = arith.addf %50, %53 : vector<64x32xf32>
    %cst_39 = arith.constant dense<0.000000e+00> : vector<64x64xf32>
    %55 = tpu.matmul %40, %47, %cst_39 {dimension_numbers = #tpu.dot_dimension_numbers<[1], [1], [0], [0], [0, 0, 1, 0], [], []>} : vector<64x32xf32>, vector<64x32xf32>, vector<64x64xf32> -> vector<64x64xf32>
    %cst_40 = arith.constant dense<0xFF800000> : vector<64xf32>
    %56 = vector.multi_reduction <maximumf>, %55, %cst_40 [1] : vector<64x64xf32> to vector<64xf32>
    %57 = vector.shape_cast %56 : vector<64xf32> to vector<64x1xf32>
    %58 = vector.broadcast %57 : vector<64x1xf32> to vector<64x64xf32>
    %59 = arith.subf %55, %58 : vector<64x64xf32>
    %60 = math.exp %59 : vector<64x64xf32>
    %cst_41 = arith.constant dense<0.000000e+00> : vector<64xf32>
    %61 = vector.multi_reduction <add>, %60, %cst_41 [1] : vector<64x64xf32> to vector<64xf32>
    %62 = vector.shape_cast %61 : vector<64xf32> to vector<64x1xf32>
    %63 = tpu.reciprocal %62 {approx = true} : vector<64x1xf32> -> vector<64x1xf32>
    %64 = vector.broadcast %63 : vector<64x1xf32> to vector<64x64xf32>
    %65 = arith.mulf %60, %64 : vector<64x64xf32>
    %cst_42 = arith.constant dense<0.000000e+00> : vector<64x32xf32>
    %66 = tpu.matmul %65, %54, %cst_42 {dimension_numbers = #tpu.dot_dimension_numbers<[1], [0], [0], [1], [0, 0, 1, 1], [], []>} : vector<64x64xf32>, vector<64x32xf32>, vector<64x32xf32> -> vector<64x32xf32>
    %c0_43 = arith.constant 0 : index
    %c0_44 = arith.constant 0 : index
    %c0_45 = arith.constant 0 : index
    %67 = vector.load %arg11[%c0_43, %c0_44, %c0_45] : memref<2x32x64xf32, #tpu.memory_space<vmem>>, vector<1x32x64xf32>
    %68 = vector.shape_cast %67 : vector<1x32x64xf32> to vector<32x64xf32>
    %cst_46 = arith.constant dense<0.000000e+00> : vector<64x64xf32>
    %69 = tpu.matmul %66, %68, %cst_46 {dimension_numbers = #tpu.dot_dimension_numbers<[1], [0], [0], [1], [0, 0, 1, 1], [], []>} : vector<64x32xf32>, vector<32x64xf32>, vector<64x64xf32> -> vector<64x64xf32>
    %70 = arith.addf %31, %69 : vector<64x64xf32>
    %c1 = arith.constant 1 : index
    %c0_47 = arith.constant 0 : index
    %c0_48 = arith.constant 0 : index
    %71 = vector.load %arg5[%c1, %c0_47, %c0_48] : memref<2x64x32xf32, #tpu.memory_space<vmem>>, vector<1x64x32xf32>
    %72 = vector.shape_cast %71 : vector<1x64x32xf32> to vector<64x32xf32>
    %cst_49 = arith.constant dense<0.000000e+00> : vector<64x32xf32>
    %73 = tpu.matmul %30, %72, %cst_49 {dimension_numbers = #tpu.dot_dimension_numbers<[1], [0], [0], [1], [0, 0, 1, 1], [], []>} : vector<64x64xf32>, vector<64x32xf32>, vector<64x32xf32> -> vector<64x32xf32>
    %c1_50 = arith.constant 1 : index
    %c0_51 = arith.constant 0 : index
    %c0_52 = arith.constant 0 : index
    %74 = vector.load %arg8[%c1_50, %c0_51, %c0_52] : memref<2x1x32xf32, #tpu.memory_space<vmem>>, vector<1x1x32xf32>
    %75 = vector.shape_cast %74 : vector<1x1x32xf32> to vector<1x32xf32>
    %76 = vector.broadcast %75 : vector<1x32xf32> to vector<64x32xf32>
    %77 = arith.addf %73, %76 : vector<64x32xf32>
    %cst_53 = arith.constant 0.176776692 : f32
    %78 = vector.broadcast %cst_53 : f32 to vector<64x32xf32>
    %79 = arith.mulf %77, %78 : vector<64x32xf32>
    %c1_54 = arith.constant 1 : index
    %c0_55 = arith.constant 0 : index
    %c0_56 = arith.constant 0 : index
    %80 = vector.load %arg6[%c1_54, %c0_55, %c0_56] : memref<2x64x32xf32, #tpu.memory_space<vmem>>, vector<1x64x32xf32>
    %81 = vector.shape_cast %80 : vector<1x64x32xf32> to vector<64x32xf32>
    %cst_57 = arith.constant dense<0.000000e+00> : vector<64x32xf32>
    %82 = tpu.matmul %30, %81, %cst_57 {dimension_numbers = #tpu.dot_dimension_numbers<[1], [0], [0], [1], [0, 0, 1, 1], [], []>} : vector<64x64xf32>, vector<64x32xf32>, vector<64x32xf32> -> vector<64x32xf32>
    %c1_58 = arith.constant 1 : index
    %c0_59 = arith.constant 0 : index
    %c0_60 = arith.constant 0 : index
    %83 = vector.load %arg9[%c1_58, %c0_59, %c0_60] : memref<2x1x32xf32, #tpu.memory_space<vmem>>, vector<1x1x32xf32>
    %84 = vector.shape_cast %83 : vector<1x1x32xf32> to vector<1x32xf32>
    %85 = vector.broadcast %84 : vector<1x32xf32> to vector<64x32xf32>
    %86 = arith.addf %82, %85 : vector<64x32xf32>
    %c1_61 = arith.constant 1 : index
    %c0_62 = arith.constant 0 : index
    %c0_63 = arith.constant 0 : index
    %87 = vector.load %arg7[%c1_61, %c0_62, %c0_63] : memref<2x64x32xf32, #tpu.memory_space<vmem>>, vector<1x64x32xf32>
    %88 = vector.shape_cast %87 : vector<1x64x32xf32> to vector<64x32xf32>
    %cst_64 = arith.constant dense<0.000000e+00> : vector<64x32xf32>
    %89 = tpu.matmul %30, %88, %cst_64 {dimension_numbers = #tpu.dot_dimension_numbers<[1], [0], [0], [1], [0, 0, 1, 1], [], []>} : vector<64x64xf32>, vector<64x32xf32>, vector<64x32xf32> -> vector<64x32xf32>
    %c1_65 = arith.constant 1 : index
    %c0_66 = arith.constant 0 : index
    %c0_67 = arith.constant 0 : index
    %90 = vector.load %arg10[%c1_65, %c0_66, %c0_67] : memref<2x1x32xf32, #tpu.memory_space<vmem>>, vector<1x1x32xf32>
    %91 = vector.shape_cast %90 : vector<1x1x32xf32> to vector<1x32xf32>
    %92 = vector.broadcast %91 : vector<1x32xf32> to vector<64x32xf32>
    %93 = arith.addf %89, %92 : vector<64x32xf32>
    %cst_68 = arith.constant dense<0.000000e+00> : vector<64x64xf32>
    %94 = tpu.matmul %79, %86, %cst_68 {dimension_numbers = #tpu.dot_dimension_numbers<[1], [1], [0], [0], [0, 0, 1, 0], [], []>} : vector<64x32xf32>, vector<64x32xf32>, vector<64x64xf32> -> vector<64x64xf32>
    %cst_69 = arith.constant dense<0xFF800000> : vector<64xf32>
    %95 = vector.multi_reduction <maximumf>, %94, %cst_69 [1] : vector<64x64xf32> to vector<64xf32>
    %96 = vector.shape_cast %95 : vector<64xf32> to vector<64x1xf32>
    %97 = vector.broadcast %96 : vector<64x1xf32> to vector<64x64xf32>
    %98 = arith.subf %94, %97 : vector<64x64xf32>
    %99 = math.exp %98 : vector<64x64xf32>
    %cst_70 = arith.constant dense<0.000000e+00> : vector<64xf32>
    %100 = vector.multi_reduction <add>, %99, %cst_70 [1] : vector<64x64xf32> to vector<64xf32>
    %101 = vector.shape_cast %100 : vector<64xf32> to vector<64x1xf32>
    %102 = tpu.reciprocal %101 {approx = true} : vector<64x1xf32> -> vector<64x1xf32>
    %103 = vector.broadcast %102 : vector<64x1xf32> to vector<64x64xf32>
    %104 = arith.mulf %99, %103 : vector<64x64xf32>
    %cst_71 = arith.constant dense<0.000000e+00> : vector<64x32xf32>
    %105 = tpu.matmul %104, %93, %cst_71 {dimension_numbers = #tpu.dot_dimension_numbers<[1], [0], [0], [1], [0, 0, 1, 1], [], []>} : vector<64x64xf32>, vector<64x32xf32>, vector<64x32xf32> -> vector<64x32xf32>
    %c1_72 = arith.constant 1 : index
    %c0_73 = arith.constant 0 : index
    %c0_74 = arith.constant 0 : index
    %106 = vector.load %arg11[%c1_72, %c0_73, %c0_74] : memref<2x32x64xf32, #tpu.memory_space<vmem>>, vector<1x32x64xf32>
    %107 = vector.shape_cast %106 : vector<1x32x64xf32> to vector<32x64xf32>
    %cst_75 = arith.constant dense<0.000000e+00> : vector<64x64xf32>
    %108 = tpu.matmul %105, %107, %cst_75 {dimension_numbers = #tpu.dot_dimension_numbers<[1], [0], [0], [1], [0, 0, 1, 1], [], []>} : vector<64x32xf32>, vector<32x64xf32>, vector<64x64xf32> -> vector<64x64xf32>
    %109 = arith.addf %70, %108 : vector<64x64xf32>
    %c0_76 = arith.constant 0 : index
    %c0_77 = arith.constant 0 : index
    %110 = vector.load %arg12[%c0_76, %c0_77] : memref<1x64xf32, #tpu.memory_space<vmem>>, vector<1x64xf32>
    %111 = vector.broadcast %110 : vector<1x64xf32> to vector<64x64xf32>
    %112 = arith.addf %109, %111 : vector<64x64xf32>
    %113 = arith.addf %112, %1 : vector<64x64xf32>
    %c0_78 = arith.constant 0 : index
    %c0_79 = arith.constant 0 : index
    %c0_80 = arith.constant 0 : index
    %114 = vector.load %arg13[%c0_78, %c0_79, %c0_80] : memref<1x64x64xf32, #tpu.memory_space<vmem>>, vector<1x64x64xf32>
    %115 = vector.shape_cast %114 : vector<1x64x64xf32> to vector<64x64xf32>
    %116 = vector.shape_cast %113 : vector<64x64xf32> to vector<1x64x64xf32>
    tpu.vector_store %arg13[%c0_78, %c0_79, %c0_80], %116 {strides = array<i32>} : memref<1x64x64xf32, #tpu.memory_space<vmem>>, vector<1x64x64xf32>,
    return
  }
  func.func @transform_0(%arg0: i32) -> (i32, i32, i32) {
    %c0_i32 = arith.constant 0 : i32
    %c0_i32_0 = arith.constant 0 : i32
    %c0_i32_1 = arith.constant 0 : i32
    return %arg0, %c0_i32, %c0_i32_0 : i32, i32, i32
  }
  func.func @transform_1(%arg0: i32) -> (i32, i32) {
    %c0_i32 = arith.constant 0 : i32
    %c0_i32_0 = arith.constant 0 : i32
    %c0_i32_1 = arith.constant 0 : i32
    return %c0_i32, %c0_i32_0 : i32, i32
  }
  func.func @transform_2(%arg0: i32) -> (i32, i32) {
    %c0_i32 = arith.constant 0 : i32
    %c0_i32_0 = arith.constant 0 : i32
    %c0_i32_1 = arith.constant 0 : i32
    return %c0_i32, %c0_i32_0 : i32, i32
  }
  func.func @transform_3(%arg0: i32) -> (i32, i32) {
    %c0_i32 = arith.constant 0 : i32
    %c0_i32_0 = arith.constant 0 : i32
    %c0_i32_1 = arith.constant 0 : i32
    return %c0_i32, %c0_i32_0 : i32, i32
  }
  func.func @transform_4(%arg0: i32) -> (i32, i32, i32) {
    %c0_i32 = arith.constant 0 : i32
    %c0_i32_0 = arith.constant 0 : i32
    %c0_i32_1 = arith.constant 0 : i32
    %c0_i32_2 = arith.constant 0 : i32
    return %c0_i32, %c0_i32_0, %c0_i32_1 : i32, i32, i32
  }
  func.func @transform_5(%arg0: i32) -> (i32, i32, i32) {
    %c0_i32 = arith.constant 0 : i32
    %c0_i32_0 = arith.constant 0 : i32
    %c0_i32_1 = arith.constant 0 : i32
    %c0_i32_2 = arith.constant 0 : i32
    return %c0_i32, %c0_i32_0, %c0_i32_1 : i32, i32, i32
  }
  func.func @transform_6(%arg0: i32) -> (i32, i32, i32) {
    %c0_i32 = arith.constant 0 : i32
    %c0_i32_0 = arith.constant 0 : i32
    %c0_i32_1 = arith.constant 0 : i32
    %c0_i32_2 = arith.constant 0 : i32
    return %c0_i32, %c0_i32_0, %c0_i32_1 : i32, i32, i32
  }
  func.func @transform_7(%arg0: i32) -> (i32, i32, i32) {
    %c0_i32 = arith.constant 0 : i32
    %c0_i32_0 = arith.constant 0 : i32
    %c0_i32_1 = arith.constant 0 : i32
    %c0_i32_2 = arith.constant 0 : i32
    return %c0_i32, %c0_i32_0, %c0_i32_1 : i32, i32, i32
  }
  func.func @transform_8(%arg0: i32) -> (i32, i32, i32) {
    %c0_i32 = arith.constant 0 : i32
    %c0_i32_0 = arith.constant 0 : i32
    %c0_i32_1 = arith.constant 0 : i32
    %c0_i32_2 = arith.constant 0 : i32
    return %c0_i32, %c0_i32_0, %c0_i32_1 : i32, i32, i32
  }
  func.func @transform_9(%arg0: i32) -> (i32, i32, i32) {
    %c0_i32 = arith.constant 0 : i32
    %c0_i32_0 = arith.constant 0 : i32
    %c0_i32_1 = arith.constant 0 : i32
    %c0_i32_2 = arith.constant 0 : i32
    return %c0_i32, %c0_i32_0, %c0_i32_1 : i32, i32, i32
  }
  func.func @transform_10(%arg0: i32) -> (i32, i32, i32) {
    %c0_i32 = arith.constant 0 : i32
    %c0_i32_0 = arith.constant 0 : i32
    %c0_i32_1 = arith.constant 0 : i32
    %c0_i32_2 = arith.constant 0 : i32
    return %c0_i32, %c0_i32_0, %c0_i32_1 : i32, i32, i32
  }
  func.func @transform_11(%arg0: i32) -> (i32, i32) {
    %c0_i32 = arith.constant 0 : i32
    %c0_i32_0 = arith.constant 0 : i32
    %c0_i32_1 = arith.constant 0 : i32
    return %c0_i32, %c0_i32_0 : i32, i32
  }
  func.func @transform_12(%arg0: i32) -> (i32, i32, i32) {
    %c0_i32 = arith.constant 0 : i32
    %c0_i32_0 = arith.constant 0 : i32
    %c0_i32_1 = arith.constant 0 : i32
    return %arg0, %c0_i32, %c0_i32_0 : i32, i32, i32
  }
}

</mosaic_0001>

<llo_original>
// kernel: tpu_custom_call.1
$region0: #{tpu_custom_call.1}
  #allocation0 [shape = 'u32[]', space=smem, size = 0x4, offset = 0x4, fixed_abs, tag = 'smem constant byte address 0x4 - core index']
  #allocation1 [shape = 'u32[144,128]{1,0:T(1,128)}', space=vmem, size = 0x12000, scoped, tag = 'internal scratch']
  %s0 = inlined_call_operand.vmem [shape: f32[2,64,64], index: 0, kind: input, shape index: {}]
  %s1 = inlined_call_operand.vmem [shape: f32[1,64], index: 1, kind: input, shape index: {}]
  %s2 = inlined_call_operand.vmem [shape: f32[1,64], index: 2, kind: input, shape index: {}]
  %s3 = inlined_call_operand.vmem [shape: f32[64,32], index: 3, kind: input, shape index: {}]
  %s4 = inlined_call_operand.vmem [shape: f32[2,64,32], index: 4, kind: input, shape index: {}]
  %s5 = inlined_call_operand.vmem [shape: f32[2,64,32], index: 5, kind: input, shape index: {}]
  %s6 = inlined_call_operand.vmem [shape: f32[2,64,32], index: 6, kind: input, shape index: {}]
  %s7 = inlined_call_operand.vmem [shape: f32[2,1,32], index: 7, kind: input, shape index: {}]
  %s8 = inlined_call_operand.vmem [shape: f32[2,1,32], index: 8, kind: input, shape index: {}]
  %s9 = inlined_call_operand.vmem [shape: f32[2,1,32], index: 9, kind: input, shape index: {}]
  %s10 = inlined_call_operand.vmem [shape: f32[2,32,64], index: 10, kind: input, shape index: {}]
  %s11 = inlined_call_operand.vmem [shape: f32[1,64], index: 11, kind: input, shape index: {}]
  %s12 = inlined_call_operand.hbm [shape: f32[2,64,64], index: 12, kind: output, shape index: {}]
  %s13 = sld [smem:[#allocation0]]
  $region81: #{tpu_custom_call.1} parent=0
    _
  %s15 = ssub.s32 1, %s13
  %s16 = scalar_select 0, %s15, %s13
  $region1: #{tpu_custom_call.1} parent=0
    #allocation2 [shape = 'u8[65536]{0}', space=vmem, size = 0x10000, scoped, tag = 'output window, operand 0']
    #allocation3 [shape = 's32[2]{0}', space=sflag, size = 0x8, scoped, tag = 'scoped memory for tpu_custom_call.1']
    %17 = vsyncpa [#allocation3], 0
    %s18 = scalar_lea.sflag [#allocation3], 1
    %19 = vsyncpa %s18, 0
    loop: start=0, step=1, limit=4
    $region2: #{tpu_custom_call.1} parent=1 // loop_pre_header
      _
    $region3: #{tpu_custom_call.1} parent=1 // loop_header
      %s21 = sphi 0, %s25
      %p22 = scmp.ge.s32.totalorder %s21, 4
      %s31 = sphi 0, %s33
      %s34 = sphi 0, %s31
      %s35 = sphi 0, %s34
      %s51 = sphi 0, %s35
      %s55 = sphi 0, %s55
      %s57 = sphi 0, %s55
      %s58 = sphi 0, %s57
      %s72 = sphi 0, %s58
      %s76 = sphi 0, %s76
      %s78 = sphi 0, %s76
      %s79 = sphi 0, %s78
      %s93 = sphi 0, %s79
      %s97 = sphi 0, %s97
      %s99 = sphi 0, %s97
      %s100 = sphi 0, %s99
      %s114 = sphi 0, %s100
      %s118 = sphi 0, %s118
      %s120 = sphi 0, %s118
      %s121 = sphi 0, %s120
      %s135 = sphi 0, %s121
      %s139 = sphi 0, %s139
      %s141 = sphi 0, %s139
      %s142 = sphi 0, %s141
      %s156 = sphi 0, %s142
      %s160 = sphi 0, %s160
      %s162 = sphi 0, %s160
      %s163 = sphi 0, %s162
      %s177 = sphi 0, %s163
      %s181 = sphi 0, %s181
      %s183 = sphi 0, %s181
      %s184 = sphi 0, %s183
      %s198 = sphi 0, %s184
      %s202 = sphi 0, %s202
      %s204 = sphi 0, %s202
      %s205 = sphi 0, %s204
      %s219 = sphi 0, %s205
      %s223 = sphi 0, %s223
      %s225 = sphi 0, %s223
      %s226 = sphi 0, %s225
      %s240 = sphi 0, %s226
      %s244 = sphi 0, %s244
      %s246 = sphi 0, %s244
      %s247 = sphi 0, %s246
      %s261 = sphi 0, %s247
      %s265 = sphi 0, %s265
      %s267 = sphi 0, %s265
      %s268 = sphi 0, %s267
      %s282 = sphi 0, %s268
      %s288 = sphi 0, %s290
      %s291 = sphi 0, %s288
      %s292 = sphi 0, %s291
      %s308 = sphi 0, %s292
    $region4: #{tpu_custom_call.1} parent=1 // loop_header_branch
      %24 = sbr.rel (%p22) target = $region8
    $region5: #{tpu_custom_call.1} parent=1 // loop_body
      %s26 = ssub.s32 %s21, 1
      %s27 = ssub.s32 %s21, 2
      %s28 = sadd.s32 %s21, 1
      %s29 = ssub.s32 %s21, %s28
      %p30 = scmp.eq.s32.totalorder %s29, 0
      %s32 = sadd.s32 %s31, 1
      %s33 = scalar_select %p30, %s31, %s32
      %p36 = pneg %p30
      %p37 = scmp.eq.s32.totalorder %s21, 1
      %p38 = por %p36, %p37
      %p39 = scmp.ne.s32.totalorder %s31, %s34
      %p40 = scmp.eq.s32.totalorder %s21, 0
      %p41 = por %p39, %p40
      %p42 = scmp.ne.s32.totalorder %s31, %s34
      %p43 = scmp.eq.s32.totalorder %s26, 1
      %p44 = por %p42, %p43
      %p45 = scmp.ne.s32.totalorder %s34, %s35
      %p46 = scmp.eq.s32.totalorder %s26, 0
      %p47 = por %p45, %p46
      %p48 = scmp.ne.s32.totalorder %s34, %s35
      %p49 = scmp.eq.s32.totalorder %s27, 1
      %p50 = por %p48, %p49
      %p52 = scmp.ne.s32.totalorder %s35, %s51
      %p53 = scmp.eq.s32.totalorder %s27, 0
      %p54 = por %p52, %p53
      %s56 = sadd.s32 %s55, 1
      %p59 = scmp.eq.s32.totalorder %s21, 1
      %p60 = scmp.ne.s32.totalorder %s55, %s57
      %p61 = scmp.eq.s32.totalorder %s21, 0
      %p62 = por %p60, %p61
      %p63 = scmp.ne.s32.totalorder %s55, %s57
      %p64 = scmp.eq.s32.totalorder %s26, 1
      %p65 = por %p63, %p64
      %p66 = scmp.ne.s32.totalorder %s57, %s58
      %p67 = scmp.eq.s32.totalorder %s26, 0
      %p68 = por %p66, %p67
      %p69 = scmp.ne.s32.totalorder %s57, %s58
      %p70 = scmp.eq.s32.totalorder %s27, 1
      %p71 = por %p69, %p70
      %p73 = scmp.ne.s32.totalorder %s58, %s72
      %p74 = scmp.eq.s32.totalorder %s27, 0
      %p75 = por %p73, %p74
      %s77 = sadd.s32 %s76, 1
      %p80 = scmp.eq.s32.totalorder %s21, 1
      %p81 = scmp.ne.s32.totalorder %s76, %s78
      %p82 = scmp.eq.s32.totalorder %s21, 0
      %p83 = por %p81, %p82
      %p84 = scmp.ne.s32.totalorder %s76, %s78
      %p85 = scmp.eq.s32.totalorder %s26, 1
      %p86 = por %p84, %p85
      %p87 = scmp.ne.s32.totalorder %s78, %s79
      %p88 = scmp.eq.s32.totalorder %s26, 0
      %p89 = por %p87, %p88
      %p90 = scmp.ne.s32.totalorder %s78, %s79
      %p91 = scmp.eq.s32.totalorder %s27, 1
      %p92 = por %p90, %p91
      %p94 = scmp.ne.s32.totalorder %s79, %s93
      %p95 = scmp.eq.s32.totalorder %s27, 0
      %p96 = por %p94, %p95
      %s98 = sadd.s32 %s97, 1
      %p101 = scmp.eq.s32.totalorder %s21, 1
      %p102 = scmp.ne.s32.totalorder %s97, %s99
      %p103 = scmp.eq.s32.totalorder %s21, 0
      %p104 = por %p102, %p103
      %p105 = scmp.ne.s32.totalorder %s97, %s99
      %p106 = scmp.eq.s32.totalorder %s26, 1
      %p107 = por %p105, %p106
      %p108 = scmp.ne.s32.totalorder %s99, %s100
      %p109 = scmp.eq.s32.totalorder %s26, 0
      %p110 = por %p108, %p109
      %p111 = scmp.ne.s32.totalorder %s99, %s100
      %p112 = scmp.eq.s32.totalorder %s27, 1
      %p113 = por %p111, %p112
      %p115 = scmp.ne.s32.totalorder %s100, %s114
      %p116 = scmp.eq.s32.totalorder %s27, 0
      %p117 = por %p115, %p116
      %s119 = sadd.s32 %s118, 1
      %p122 = scmp.eq.s32.totalorder %s21, 1
      %p123 = scmp.ne.s32.totalorder %s118, %s120
      %p124 = scmp.eq.s32.totalorder %s21, 0
      %p125 = por %p123, %p124
      %p126 = scmp.ne.s32.totalorder %s118, %s120
      %p127 = scmp.eq.s32.totalorder %s26, 1
      %p128 = por %p126, %p127
      %p129 = scmp.ne.s32.totalorder %s120, %s121
      %p130 = scmp.eq.s32.totalorder %s26, 0
      %p131 = por %p129, %p130
      %p132 = scmp.ne.s32.totalorder %s120, %s121
      %p133 = scmp.eq.s32.totalorder %s27, 1
      %p134 = por %p132, %p133
      %p136 = scmp.ne.s32.totalorder %s121, %s135
      %p137 = scmp.eq.s32.totalorder %s27, 0
      %p138 = por %p136, %p137
      %s140 = sadd.s32 %s139, 1
      %p143 = scmp.eq.s32.totalorder %s21, 1
      %p144 = scmp.ne.s32.totalorder %s139, %s141
      %p145 = scmp.eq.s32.totalorder %s21, 0
      %p146 = por %p144, %p145
      %p147 = scmp.ne.s32.totalorder %s139, %s141
      %p148 = scmp.eq.s32.totalorder %s26, 1
      %p149 = por %p147, %p148
      %p150 = scmp.ne.s32.totalorder %s141, %s142
      %p151 = scmp.eq.s32.totalorder %s26, 0
      %p152 = por %p150, %p151
      %p153 = scmp.ne.s32.totalorder %s141, %s142
      %p154 = scmp.eq.s32.totalorder %s27, 1
      %p155 = por %p153, %p154
      %p157 = scmp.ne.s32.totalorder %s142, %s156
      %p158 = scmp.eq.s32.totalorder %s27, 0
      %p159 = por %p157, %p158
      %s161 = sadd.s32 %s160, 1
      %p164 = scmp.eq.s32.totalorder %s21, 1
      %p165 = scmp.ne.s32.totalorder %s160, %s162
      %p166 = scmp.eq.s32.totalorder %s21, 0
      %p167 = por %p165, %p166
      %p168 = scmp.ne.s32.totalorder %s160, %s162
      %p169 = scmp.eq.s32.totalorder %s26, 1
      %p170 = por %p168, %p169
      %p171 = scmp.ne.s32.totalorder %s162, %s163
      %p172 = scmp.eq.s32.totalorder %s26, 0
      %p173 = por %p171, %p172
      %p174 = scmp.ne.s32.totalorder %s162, %s163
      %p175 = scmp.eq.s32.totalorder %s27, 1
      %p176 = por %p174, %p175
      %p178 = scmp.ne.s32.totalorder %s163, %s177
      %p179 = scmp.eq.s32.totalorder %s27, 0
      %p180 = por %p178, %p179
      %s182 = sadd.s32 %s181, 1
      %p185 = scmp.eq.s32.totalorder %s21, 1
      %p186 = scmp.ne.s32.totalorder %s181, %s183
      %p187 = scmp.eq.s32.totalorder %s21, 0
      %p188 = por %p186, %p187
      %p189 = scmp.ne.s32.totalorder %s181, %s183
      %p190 = scmp.eq.s32.totalorder %s26, 1
      %p191 = por %p189, %p190
      %p192 = scmp.ne.s32.totalorder %s183, %s184
      %p193 = scmp.eq.s32.totalorder %s26, 0
      %p194 = por %p192, %p193
      %p195 = scmp.ne.s32.totalorder %s183, %s184
      %p196 = scmp.eq.s32.totalorder %s27, 1
      %p197 = por %p195, %p196
      %p199 = scmp.ne.s32.totalorder %s184, %s198
      %p200 = scmp.eq.s32.totalorder %s27, 0
      %p201 = por %p199, %p200
      %s203 = sadd.s32 %s202, 1
      %p206 = scmp.eq.s32.totalorder %s21, 1
      %p207 = scmp.ne.s32.totalorder %s202, %s204
      %p208 = scmp.eq.s32.totalorder %s21, 0
      %p209 = por %p207, %p208
      %p210 = scmp.ne.s32.totalorder %s202, %s204
      %p211 = scmp.eq.s32.totalorder %s26, 1
      %p212 = por %p210, %p211
      %p213 = scmp.ne.s32.totalorder %s204, %s205
      %p214 = scmp.eq.s32.totalorder %s26, 0
      %p215 = por %p213, %p214
      %p216 = scmp.ne.s32.totalorder %s204, %s205
      %p217 = scmp.eq.s32.totalorder %s27, 1
      %p218 = por %p216, %p217
      %p220 = scmp.ne.s32.totalorder %s205, %s219
      %p221 = scmp.eq.s32.totalorder %s27, 0
      %p222 = por %p220, %p221
      %s224 = sadd.s32 %s223, 1
      %p227 = scmp.eq.s32.totalorder %s21, 1
      %p228 = scmp.ne.s32.totalorder %s223, %s225
      %p229 = scmp.eq.s32.totalorder %s21, 0
      %p230 = por %p228, %p229
      %p231 = scmp.ne.s32.totalorder %s223, %s225
      %p232 = scmp.eq.s32.totalorder %s26, 1
      %p233 = por %p231, %p232
      %p234 = scmp.ne.s32.totalorder %s225, %s226
      %p235 = scmp.eq.s32.totalorder %s26, 0
      %p236 = por %p234, %p235
      %p237 = scmp.ne.s32.totalorder %s225, %s226
      %p238 = scmp.eq.s32.totalorder %s27, 1
      %p239 = por %p237, %p238
      %p241 = scmp.ne.s32.totalorder %s226, %s240
      %p242 = scmp.eq.s32.totalorder %s27, 0
      %p243 = por %p241, %p242
      %s245 = sadd.s32 %s244, 1
      %p248 = scmp.eq.s32.totalorder %s21, 1
      %p249 = scmp.ne.s32.totalorder %s244, %s246
      %p250 = scmp.eq.s32.totalorder %s21, 0
      %p251 = por %p249, %p250
      %p252 = scmp.ne.s32.totalorder %s244, %s246
      %p253 = scmp.eq.s32.totalorder %s26, 1
      %p254 = por %p252, %p253
      %p255 = scmp.ne.s32.totalorder %s246, %s247
      %p256 = scmp.eq.s32.totalorder %s26, 0
      %p257 = por %p255, %p256
      %p258 = scmp.ne.s32.totalorder %s246, %s247
      %p259 = scmp.eq.s32.totalorder %s27, 1
      %p260 = por %p258, %p259
      %p262 = scmp.ne.s32.totalorder %s247, %s261
      %p263 = scmp.eq.s32.totalorder %s27, 0
      %p264 = por %p262, %p263
      %s266 = sadd.s32 %s265, 1
      %p269 = scmp.eq.s32.totalorder %s21, 1
      %p270 = scmp.ne.s32.totalorder %s265, %s267
      %p271 = scmp.eq.s32.totalorder %s21, 0
      %p272 = por %p270, %p271
      %p273 = scmp.ne.s32.totalorder %s265, %s267
      %p274 = scmp.eq.s32.totalorder %s26, 1
      %p275 = por %p273, %p274
      %p276 = scmp.ne.s32.totalorder %s267, %s268
      %p277 = scmp.eq.s32.totalorder %s26, 0
      %p278 = por %p276, %p277
      %p279 = scmp.ne.s32.totalorder %s267, %s268
      %p280 = scmp.eq.s32.totalorder %s27, 1
      %p281 = por %p279, %p280
      %p283 = scmp.ne.s32.totalorder %s268, %s282
      %p284 = scmp.eq.s32.totalorder %s27, 0
      %p285 = por %p283, %p284
      %s286 = ssub.s32 %s21, %s28
      %p287 = scmp.eq.s32.totalorder %s286, 0
      %s289 = sadd.s32 %s288, 1
      %s290 = scalar_select %p287, %s288, %s289
      %p293 = pneg %p287
      %p294 = scmp.eq.s32.totalorder %s21, 1
      %p295 = por %p293, %p294
      %p296 = scmp.ne.s32.totalorder %s288, %s291
      %p297 = scmp.eq.s32.totalorder %s21, 0
      %p298 = por %p296, %p297
      %p299 = scmp.ne.s32.totalorder %s288, %s291
      %p300 = scmp.eq.s32.totalorder %s26, 1
      %p301 = por %p299, %p300
      %p302 = scmp.ne.s32.totalorder %s291, %s292
      %p303 = scmp.eq.s32.totalorder %s26, 0
      %p304 = por %p302, %p303
      %p305 = scmp.ne.s32.totalorder %s291, %s292
      %p306 = scmp.eq.s32.totalorder %s27, 1
      %p307 = por %p305, %p306
      %p309 = scmp.ne.s32.totalorder %s292, %s308
      %p310 = scmp.eq.s32.totalorder %s27, 0
      %p311 = por %p309, %p310
      %p312 = scmp.le.s32.totalorder 1, %s21
      %p313 = scmp.lt.s32.totalorder %s21, 3
      %p314 = pnand %p312, %p313
      %p315 = pneg %p314
      // Predicated region
      $region9: #{tpu_custom_call.1} parent=5 // pred_check
        _
      $region10: #{tpu_custom_call.1} parent=5 // pred_check_branch
        %317 = sbr.rel (%p314) target = $region12
      $region11: #{tpu_custom_call.1} parent=5 // pred_region
        %s318 = ssub.s32 %s21, 1
        // Predicated region
        $region13: #{tpu_custom_call.1} parent=11 // pred_check
          %p319 = pneg %p68
        $region14: #{tpu_custom_call.1} parent=11 // pred_check_branch
          %321 = sbr.rel (%p319) target = $region16
        $region15: #{tpu_custom_call.1} parent=11 // pred_region
          _
        $region16: #{tpu_custom_call.1} parent=11 // pred_fallthru
          _
        // Predicated region
        $region17: #{tpu_custom_call.1} parent=11 // pred_check
          %p322 = pneg %p89
        $region18: #{tpu_custom_call.1} parent=11 // pred_check_branch
          %324 = sbr.rel (%p322) target = $region20
        $region19: #{tpu_custom_call.1} parent=11 // pred_region
          _
        $region20: #{tpu_custom_call.1} parent=11 // pred_fallthru
          _
        // Predicated region
        $region21: #{tpu_custom_call.1} parent=11 // pred_check
          %p325 = pneg %p110
        $region22: #{tpu_custom_call.1} parent=11 // pred_check_branch
          %327 = sbr.rel (%p325) target = $region24
        $region23: #{tpu_custom_call.1} parent=11 // pred_region
          _
        $region24: #{tpu_custom_call.1} parent=11 // pred_fallthru
          _
        // Predicated region
        $region25: #{tpu_custom_call.1} parent=11 // pred_check
          %p328 = pneg %p131
        $region26: #{tpu_custom_call.1} parent=11 // pred_check_branch
          %330 = sbr.rel (%p328) target = $region28
        $region27: #{tpu_custom_call.1} parent=11 // pred_region
          _
        $region28: #{tpu_custom_call.1} parent=11 // pred_fallthru
          _
        // Predicated region
        $region29: #{tpu_custom_call.1} parent=11 // pred_check
          %p331 = pneg %p152
        $region30: #{tpu_custom_call.1} parent=11 // pred_check_branch
          %333 = sbr.rel (%p331) target = $region32
        $region31: #{tpu_custom_call.1} parent=11 // pred_region
          _
        $region32: #{tpu_custom_call.1} parent=11 // pred_fallthru
          _
        // Predicated region
        $region33: #{tpu_custom_call.1} parent=11 // pred_check
          %p334 = pneg %p173
        $region34: #{tpu_custom_call.1} parent=11 // pred_check_branch
          %336 = sbr.rel (%p334) target = $region36
        $region35: #{tpu_custom_call.1} parent=11 // pred_region
          _
        $region36: #{tpu_custom_call.1} parent=11 // pred_fallthru
          _
        // Predicated region
        $region37: #{tpu_custom_call.1} parent=11 // pred_check
          %p337 = pneg %p194
        $region38: #{tpu_custom_call.1} parent=11 // pred_check_branch
          %339 = sbr.rel (%p337) target = $region40
        $region39: #{tpu_custom_call.1} parent=11 // pred_region
          _
        $region40: #{tpu_custom_call.1} parent=11 // pred_fallthru
          _
        // Predicated region
        $region41: #{tpu_custom_call.1} parent=11 // pred_check
          %p340 = pneg %p215
        $region42: #{tpu_custom_call.1} parent=11 // pred_check_branch
          %342 = sbr.rel (%p340) target = $region44
        $region43: #{tpu_custom_call.1} parent=11 // pred_region
          _
        $region44: #{tpu_custom_call.1} parent=11 // pred_fallthru
          _
        // Predicated region
        $region45: #{tpu_custom_call.1} parent=11 // pred_check
          %p343 = pneg %p236
        $region46: #{tpu_custom_call.1} parent=11 // pred_check_branch
          %345 = sbr.rel (%p343) target = $region48
        $region47: #{tpu_custom_call.1} parent=11 // pred_region
          _
        $region48: #{tpu_custom_call.1} parent=11 // pred_fallthru
          _
        // Predicated region
        $region49: #{tpu_custom_call.1} parent=11 // pred_check
          %p346 = pneg %p257
        $region50: #{tpu_custom_call.1} parent=11 // pred_check_branch
          %348 = sbr.rel (%p346) target = $region52
        $region51: #{tpu_custom_call.1} parent=11 // pred_region
          _
        $region52: #{tpu_custom_call.1} parent=11 // pred_fallthru
          _
        // Predicated region
        $region53: #{tpu_custom_call.1} parent=11 // pred_check
          %p349 = pneg %p278
        $region54: #{tpu_custom_call.1} parent=11 // pred_check_branch
          %351 = sbr.rel (%p349) target = $region56
        $region55: #{tpu_custom_call.1} parent=11 // pred_region
          _
        $region56: #{tpu_custom_call.1} parent=11 // pred_fallthru
          _
      $region12: #{tpu_custom_call.1} parent=5 // pred_fallthru
        _
      %p352 = scmp.lt.s32.totalorder %s21, 2
      // Predicated region
      $region57: #{tpu_custom_call.1} parent=5 // pred_check
        %p353 = pneg %p352
      $region58: #{tpu_custom_call.1} parent=5 // pred_check_branch
        %355 = sbr.rel (%p353) target = $region60
      $region59: #{tpu_custom_call.1} parent=5 // pred_region
        // Predicated region
        $region61: #{tpu_custom_call.1} parent=59 // pred_check
          %p356 = pneg %p41
        $region62: #{tpu_custom_call.1} parent=59 // pred_check_branch
          %358 = sbr.rel (%p356) target = $region64
        $region63: #{tpu_custom_call.1} parent=59 // pred_region
          %p359 = scmp.lt.s32.totalorder %s21, 1
          %s360 = scalar_select %p359, %s21, 1
          %s361 = smul.addr %s360, 8
          %s362 = smul.addr %s361, 8
          %s363 = scalar_lea.vmem %s0, %s362
        $region64: #{tpu_custom_call.1} parent=59 // pred_fallthru
          _
      $region60: #{tpu_custom_call.1} parent=5 // pred_fallthru
        _
      %p364 = scmp.le.s32.totalorder 1, %s21
      %p365 = scmp.lt.s32.totalorder %s21, 3
      %p366 = pnand %p364, %p365
      %p367 = pneg %p366
      // Predicated region
      $region65: #{tpu_custom_call.1} parent=5 // pred_check
        _
      $region66: #{tpu_custom_call.1} parent=5 // pred_check_branch
        %369 = sbr.rel (%p366) target = $region68
      $region67: #{tpu_custom_call.1} parent=5 // pred_region
        %s370 = ssub.s32 %s21, 1
        %p371 = scmp.lt.s32.totalorder %s26, 1
        %s372 = scalar_select %p371, %s26, 1
        %s373 = smul.addr %s372, 8
        %s374 = smul.addr %s373, 8
        %s375 = scalar_lea.vmem %s0, %s374
        %p376 = pneg %p47
        %p377 = pneg %p44
        %p378 = pneg %p68
        %p379 = pneg %p65
        %p380 = pneg %p89
        %p381 = pneg %p86
        %p382 = pneg %p110
        %p383 = pneg %p107
        %p384 = pneg %p131
        %p385 = pneg %p128
        %p386 = pneg %p152
        %p387 = pneg %p149
        %p388 = pneg %p173
        %p389 = pneg %p170
        %p390 = pneg %p194
        %p391 = pneg %p191
        %p392 = pneg %p215
        %p393 = pneg %p212
        %p394 = pneg %p236
        %p395 = pneg %p233
        %p396 = pneg %p257
        %p397 = pneg %p254
        %p398 = pneg %p278
        %p399 = pneg %p275
        %p400 = pneg %p304
        %p401 = pneg %p301
        %s402 = sand.u32 %s291, 1
        %s403 = scalar_lea.sflag [#allocation3], %s402
        %s404 = sand.u32 %s291, 1
        %s405 = smul.addr %s404, 64
        %s406 = scalar_lea.vmem [#allocation2], %s405
        %p407 = scmp.lt.s32.totalorder %s26, 1
        %s408 = scalar_select %p407, %s26, 1
        %s409 = smul.addr %s408, 8
        %s410 = smul.addr %s409, 8
        %s411 = scalar_lea.vmem %s0, %s410
        %v412 = vld [vmem:[%s411] sm:$0xff]
        %v413 = vld [vmem:[%s411 + $0x8] sm:$0xff]
        %v414 = vld [vmem:[%s411 + $0x10] sm:$0xff]
        %v415 = vld [vmem:[%s411 + $0x18] sm:$0xff]
        %v416 = vld [vmem:[%s411 + $0x20] sm:$0xff]
        %v417 = vld [vmem:[%s411 + $0x28] sm:$0xff]
        %v418 = vld [vmem:[%s411 + $0x30] sm:$0xff]
        %v419 = vld [vmem:[%s411 + $0x38] sm:$0xff]
        %v420 = vld [vmem:[%s3] sm:$0xff]
        %v421 = vld [vmem:[%s3 + $0x8] sm:$0xff]
        %v422 = vld [vmem:[%s3 + $0x10] sm:$0xff]
        %v423 = vld [vmem:[%s3 + $0x18] sm:$0xff]
        %v424 = vld [vmem:[%s3 + $0x20] sm:$0xff]
        %v425 = vld [vmem:[%s3 + $0x28] sm:$0xff]
        %v426 = vld [vmem:[%s3 + $0x30] sm:$0xff]
        %v427 = vld [vmem:[%s3 + $0x38] sm:$0xff]
        %vm428 = vcmask 523264
        %v429 = vsel %vm428, %v412, 0.0
        %v430 = vsel %vm428, %v413, 0.0
        %v431 = vadd.f32 %v429, %v430
        %v432 = vsel %vm428, %v414, 0.0
        %v433 = vadd.f32 %v431, %v432
        %v434 = vsel %vm428, %v415, 0.0
        %v435 = vadd.f32 %v433, %v434
        %v436 = vsel %vm428, %v416, 0.0
        %v437 = vadd.f32 %v435, %v436
        %v438 = vsel %vm428, %v417, 0.0
        %v439 = vadd.f32 %v437, %v438
        %v440 = vsel %vm428, %v418, 0.0
        %v441 = vadd.f32 %v439, %v440
        %v442 = vsel %vm428, %v419, 0.0
        %v443 = vadd.f32 %v441, %v442
        %v444 = vrot.slane %v443, 4
        %v445 = vadd.f32 %v443, %v444
        %v446 = vrot.slane %v445, 2
        %v447 = vadd.f32 %v445, %v446
        %v448 = vrot.slane %v447, 1
        %v449 = vadd.f32 %v447, %v448
        %v450 = vmul.f32 %v412, %v412
        %v451 = vmul.f32 %v413, %v413
        %v452 = vmul.f32 %v414, %v414
        %v453 = vmul.f32 %v415, %v415
        %v454 = vmul.f32 %v416, %v416
        %v455 = vmul.f32 %v417, %v417
        %v456 = vmul.f32 %v418, %v418
        %v457 = vmul.f32 %v419, %v419
        %v458 = vsel %vm428, %v450, 0.0
        %v459 = vsel %vm428, %v451, 0.0
        %v460 = vadd.f32 %v458, %v459
        %v461 = vsel %vm428, %v452, 0.0
        %v462 = vadd.f32 %v460, %v461
        %v463 = vsel %vm428, %v453, 0.0
        %v464 = vadd.f32 %v462, %v463
        %v465 = vsel %vm428, %v454, 0.0
        %v466 = vadd.f32 %v464, %v465
        %v467 = vsel %vm428, %v455, 0.0
        %v468 = vadd.f32 %v466, %v467
        %v469 = vsel %vm428, %v456, 0.0
        %v470 = vadd.f32 %v468, %v469
        %v471 = vsel %vm428, %v457, 0.0
        %v472 = vadd.f32 %v470, %v471
        %v473 = vrot.slane %v472, 4
        %v474 = vadd.f32 %v472, %v473
        %v475 = vrot.slane %v474, 2
        %v476 = vadd.f32 %v474, %v475
        %v477 = vrot.slane %v476, 1
        %v478 = vadd.f32 %v476, %v477
        %v480 = vsel %vm428, %v449, 0
        %482 = vmatprep.subr.mxu0 0.0
        %483 = vmatpush1.msra.mxu0 0.0
        %484 = vmatprep.subr.mxu0 0.0
        %485 = vmatpush1.msra.mxu0 0.0
        %486 = vmatprep.subr.mxu0 0.0
        %487 = vmatpush1.msra.mxu0 0.0
        %488 = vmatprep.subr.mxu0 0.0
        %489 = vmatpush1.msra.mxu0 0.0
        %490 = vmatprep.subr.mxu0 0.0
        %491 = vmatpush1.msra.mxu0 0.0
        %492 = vmatprep.subr.mxu0 0.0
        %493 = vmatpush1.msra.mxu0 0.0
        %494 = vmatprep.subr.mxu0 0.0
        %495 = vmatpush1.msra.mxu0 0.0
        %496 = vmatprep.subr.mxu0 0.0
        %497 = vmatpush1.msra.mxu0 0.0
        %498 = vmatprep.subr.mxu0 0.0
        %499 = vmatpush1.msra.mxu0 %v427
        %500 = vmatprep.subr.mxu0 0.0
        %501 = vmatpush1.msra.mxu0 %v426
        %502 = vmatprep.subr.mxu0 0.0
        %503 = vmatpush1.msra.mxu0 %v425
        %504 = vmatprep.subr.mxu0 0.0
        %505 = vmatpush1.msra.mxu0 %v424
        %506 = vmatprep.subr.mxu0 0.0
        %507 = vmatpush1.msra.mxu0 %v423
        %508 = vmatprep.subr.mxu0 0.0
        %509 = vmatpush1.msra.mxu0 %v422
        %510 = vmatprep.subr.mxu0 0.0
        %511 = vmatpush1.msra.mxu0 %v421
        %512 = vmatprep.subr.mxu0 0.0
        %513 = vmatpush1.msra.mxu0 %v420
        %514 = vmatprep.subr.mxu0 0.0
        %515 = vmatpush2.msra.mxu0 0.0
        %516 = vmatprep.subr.mxu0 0.0
        %517 = vmatpush2.msra.mxu0 0.0
        %518 = vmatprep.subr.mxu0 0.0
        %519 = vmatpush2.msra.mxu0 0.0
        %520 = vmatprep.subr.mxu0 0.0
        %521 = vmatpush2.msra.mxu0 0.0
        %522 = vmatprep.subr.mxu0 0.0
        %523 = vmatpush2.msra.mxu0 0.0
        %524 = vmatprep.subr.mxu0 0.0
        %525 = vmatpush2.msra.mxu0 0.0
        %526 = vmatprep.subr.mxu0 0.0
        %527 = vmatpush2.msra.mxu0 0.0
        %528 = vmatprep.subr.mxu0 0.0
        %529 = vmatpush2.msra.mxu0 0.0
        %530 = vmatprep.subr.mxu0 0.0
        %531 = vmatpush2.msra.mxu0 0.0
        %532 = vmatprep.subr.mxu0 0.0
        %533 = vmatpush2.msra.mxu0 0.0
        %534 = vmatprep.subr.mxu0 0.0
        %535 = vmatpush2.msra.mxu0 0.0
        %536 = vmatprep.subr.mxu0 0.0
        %537 = vmatpush2.msra.mxu0 0.0
        %538 = vmatprep.subr.mxu0 0.0
        %539 = vmatpush2.msra.mxu0 0.0
        %540 = vmatprep.subr.mxu0 0.0
        %541 = vmatpush2.msra.mxu0 0.0
        %542 = vmatprep.subr.mxu0 0.0
        %543 = vmatpush2.msra.mxu0 0.0
        %544 = vmatprep.subr.mxu0 0.0
        %545 = vmatpush2.msra.mxu0 0.0
        %546 = vmatprep.mubr.f32.mxu0 0.0
        %547 = vmatmul.mubr.f32.gmra.mxu0 %v480
        %v548 = vpop.f32.mrf.mxu0
        %v549 = vadd.f32 0.0, %v548
        %v550 = vpop.f32.mrf.mxu0
        %551 = vdwg.mxu0
        %v553 = vsel %vm428, %v478, 0
        %555 = vmatprep.subr.mxu0 0.0
        %556 = vmatpush1.msra.mxu0 0.0
        %557 = vmatprep.subr.mxu0 0.0
        %558 = vmatpush1.msra.mxu0 0.0
        %559 = vmatprep.subr.mxu0 0.0
        %560 = vmatpush1.msra.mxu0 0.0
        %561 = vmatprep.subr.mxu0 0.0
        %562 = vmatpush1.msra.mxu0 0.0
        %563 = vmatprep.subr.mxu0 0.0
        %564 = vmatpush1.msra.mxu0 0.0
        %565 = vmatprep.subr.mxu0 0.0
        %566 = vmatpush1.msra.mxu0 0.0
        %567 = vmatprep.subr.mxu0 0.0
        %568 = vmatpush1.msra.mxu0 0.0
        %569 = vmatprep.subr.mxu0 0.0
        %570 = vmatpush1.msra.mxu0 0.0
        %571 = vmatprep.subr.mxu0 0.0
        %572 = vmatpush1.msra.mxu0 %v427
        %573 = vmatprep.subr.mxu0 0.0
        %574 = vmatpush1.msra.mxu0 %v426
        %575 = vmatprep.subr.mxu0 0.0
        %576 = vmatpush1.msra.mxu0 %v425
        %577 = vmatprep.subr.mxu0 0.0
        %578 = vmatpush1.msra.mxu0 %v424
        %579 = vmatprep.subr.mxu0 0.0
        %580 = vmatpush1.msra.mxu0 %v423
        %581 = vmatprep.subr.mxu0 0.0
        %582 = vmatpush1.msra.mxu0 %v422
        %583 = vmatprep.subr.mxu0 0.0
        %584 = vmatpush1.msra.mxu0 %v421
        %585 = vmatprep.subr.mxu0 0.0
        %586 = vmatpush1.msra.mxu0 %v420
        %587 = vmatprep.subr.mxu0 0.0
        %588 = vmatpush2.msra.mxu0 0.0
        %589 = vmatprep.subr.mxu0 0.0
        %590 = vmatpush2.msra.mxu0 0.0
        %591 = vmatprep.subr.mxu0 0.0
        %592 = vmatpush2.msra.mxu0 0.0
        %593 = vmatprep.subr.mxu0 0.0
        %594 = vmatpush2.msra.mxu0 0.0
        %595 = vmatprep.subr.mxu0 0.0
        %596 = vmatpush2.msra.mxu0 0.0
        %597 = vmatprep.subr.mxu0 0.0
        %598 = vmatpush2.msra.mxu0 0.0
        %599 = vmatprep.subr.mxu0 0.0
        %600 = vmatpush2.msra.mxu0 0.0
        %601 = vmatprep.subr.mxu0 0.0
        %602 = vmatpush2.msra.mxu0 0.0
        %603 = vmatprep.subr.mxu0 0.0
        %604 = vmatpush2.msra.mxu0 0.0
        %605 = vmatprep.subr.mxu0 0.0
        %606 = vmatpush2.msra.mxu0 0.0
        %607 = vmatprep.subr.mxu0 0.0
        %608 = vmatpush2.msra.mxu0 0.0
        %609 = vmatprep.subr.mxu0 0.0
        %610 = vmatpush2.msra.mxu0 0.0
        %611 = vmatprep.subr.mxu0 0.0
        %612 = vmatpush2.msra.mxu0 0.0
        %613 = vmatprep.subr.mxu0 0.0
        %614 = vmatpush2.msra.mxu0 0.0
        %615 = vmatprep.subr.mxu0 0.0
        %616 = vmatpush2.msra.mxu0 0.0
        %617 = vmatprep.subr.mxu0 0.0
        %618 = vmatpush2.msra.mxu0 0.0
        %619 = vmatprep.mubr.f32.mxu0 0.0
        %620 = vmatmul.mubr.f32.gmra.mxu0 %v553
        %v621 = vpop.f32.mrf.mxu0
        %v622 = vadd.f32 0.0, %v621
        %v623 = vpop.f32.mrf.mxu0
        %624 = vdwg.mxu0
        %v625 = vmul.f32 %v549, 0.0078125
        %v626 = vmul.f32 %v622, 0.0078125
        %v627 = vmul.f32 %v625, %v625
        %v628 = vsub.f32 %v626, %v627
        %v629 = vadd.f32 %v628, 1e-05
        %v630 = vrsqrt.pop %v629
        %vm631 = vcmask 261120
        %v633 = vsel %vm631, %v625, 0
        %v636 = vsel %vm631, %v420, 0
        %v639 = vsel %vm631, %v421, 0
        %v642 = vsel %vm631, %v422, 0
        %v645 = vsel %vm631, %v423, 0
        %v648 = vsel %vm631, %v424, 0
        %v651 = vsel %vm631, %v425, 0
        %v654 = vsel %vm631, %v426, 0
        %v657 = vsel %vm631, %v427, 0
        %659 = vmatprep.subr.mxu0 0.0
        %660 = vmatpush1.xpose.msra.mxu0 0.0
        %661 = vmatprep.subr.mxu0 0.0
        %662 = vmatpush1.xpose.msra.mxu0 0.0
        %663 = vmatprep.subr.mxu0 0.0
        %664 = vmatpush1.xpose.msra.mxu0 0.0
        %665 = vmatprep.subr.mxu0 0.0
        %666 = vmatpush1.xpose.msra.mxu0 0.0
        %667 = vmatprep.subr.mxu0 0.0
        %668 = vmatpush1.xpose.msra.mxu0 0.0
        %669 = vmatprep.subr.mxu0 0.0
        %670 = vmatpush1.xpose.msra.mxu0 0.0
        %671 = vmatprep.subr.mxu0 0.0
        %672 = vmatpush1.xpose.msra.mxu0 0.0
        %673 = vmatprep.subr.mxu0 0.0
        %674 = vmatpush1.xpose.msra.mxu0 0.0
        %675 = vmatprep.subr.mxu0 0.0
        %676 = vmatpush1.xpose.msra.mxu0 %v657
        %677 = vmatprep.subr.mxu0 0.0
        %678 = vmatpush1.xpose.msra.mxu0 %v654
        %679 = vmatprep.subr.mxu0 0.0
        %680 = vmatpush1.xpose.msra.mxu0 %v651
        %681 = vmatprep.subr.mxu0 0.0
        %682 = vmatpush1.xpose.msra.mxu0 %v648
        %683 = vmatprep.subr.mxu0 0.0
        %684 = vmatpush1.xpose.msra.mxu0 %v645
        %685 = vmatprep.subr.mxu0 0.0
        %686 = vmatpush1.xpose.msra.mxu0 %v642
        %687 = vmatprep.subr.mxu0 0.0
        %688 = vmatpush1.xpose.msra.mxu0 %v639
        %689 = vmatprep.subr.mxu0 0.0
        %690 = vmatpush1.xpose.msra.mxu0 %v636
        %691 = vmatprep.subr.mxu0 0.0
        %692 = vmatpush2.xpose.msra.mxu0 0.0
        %693 = vmatprep.subr.mxu0 0.0
        %694 = vmatpush2.xpose.msra.mxu0 0.0
        %695 = vmatprep.subr.mxu0 0.0
        %696 = vmatpush2.xpose.msra.mxu0 0.0
        %697 = vmatprep.subr.mxu0 0.0
        %698 = vmatpush2.xpose.msra.mxu0 0.0
        %699 = vmatprep.subr.mxu0 0.0
        %700 = vmatpush2.xpose.msra.mxu0 0.0
        %701 = vmatprep.subr.mxu0 0.0
        %702 = vmatpush2.xpose.msra.mxu0 0.0
        %703 = vmatprep.subr.mxu0 0.0
        %704 = vmatpush2.xpose.msra.mxu0 0.0
        %705 = vmatprep.subr.mxu0 0.0
        %706 = vmatpush2.xpose.msra.mxu0 0.0
        %707 = vmatprep.subr.mxu0 0.0
        %708 = vmatpush2.xpose.msra.mxu0 0.0
        %709 = vmatprep.subr.mxu0 0.0
        %710 = vmatpush2.xpose.msra.mxu0 0.0
        %711 = vmatprep.subr.mxu0 0.0
        %712 = vmatpush2.xpose.msra.mxu0 0.0
        %713 = vmatprep.subr.mxu0 0.0
        %714 = vmatpush2.xpose.msra.mxu0 0.0
        %715 = vmatprep.subr.mxu0 0.0
        %716 = vmatpush2.xpose.msra.mxu0 0.0
        %717 = vmatprep.subr.mxu0 0.0
        %718 = vmatpush2.xpose.msra.mxu0 0.0
        %719 = vmatprep.subr.mxu0 0.0
        %720 = vmatpush2.xpose.msra.mxu0 0.0
        %721 = vmatprep.subr.mxu0 0.0
        %722 = vmatpush2.xpose.msra.mxu0 0.0
        %723 = vmatprep.mubr.f32.mxu0 0.0
        %724 = vmatmul.mubr.f32.gmra.mxu0 %v633
        %v725 = vpop.f32.mrf.mxu0
        %v726 = vadd.f32 0.0, %v725
        %v727 = vpop.f32.mrf.mxu0
        %728 = vdwg.mxu0
        %v730 = vsel %vm631, %v630, 0
        %732 = vmatprep.subr.mxu0 0.0
        %733 = vmatpush1.xpose.msra.mxu0 0.0
        %734 = vmatprep.subr.mxu0 0.0
        %735 = vmatpush1.xpose.msra.mxu0 0.0
        %736 = vmatprep.subr.mxu0 0.0
        %737 = vmatpush1.xpose.msra.mxu0 0.0
        %738 = vmatprep.subr.mxu0 0.0
        %739 = vmatpush1.xpose.msra.mxu0 0.0
        %740 = vmatprep.subr.mxu0 0.0
        %741 = vmatpush1.xpose.msra.mxu0 0.0
        %742 = vmatprep.subr.mxu0 0.0
        %743 = vmatpush1.xpose.msra.mxu0 0.0
        %744 = vmatprep.subr.mxu0 0.0
        %745 = vmatpush1.xpose.msra.mxu0 0.0
        %746 = vmatprep.subr.mxu0 0.0
        %747 = vmatpush1.xpose.msra.mxu0 0.0
        %748 = vmatprep.subr.mxu0 0.0
        %749 = vmatpush1.xpose.msra.mxu0 %v657
        %750 = vmatprep.subr.mxu0 0.0
        %751 = vmatpush1.xpose.msra.mxu0 %v654
        %752 = vmatprep.subr.mxu0 0.0
        %753 = vmatpush1.xpose.msra.mxu0 %v651
        %754 = vmatprep.subr.mxu0 0.0
        %755 = vmatpush1.xpose.msra.mxu0 %v648
        %756 = vmatprep.subr.mxu0 0.0
        %757 = vmatpush1.xpose.msra.mxu0 %v645
        %758 = vmatprep.subr.mxu0 0.0
        %759 = vmatpush1.xpose.msra.mxu0 %v642
        %760 = vmatprep.subr.mxu0 0.0
        %761 = vmatpush1.xpose.msra.mxu0 %v639
        %762 = vmatprep.subr.mxu0 0.0
        %763 = vmatpush1.xpose.msra.mxu0 %v636
        %764 = vmatprep.subr.mxu0 0.0
        %765 = vmatpush2.xpose.msra.mxu0 0.0
        %766 = vmatprep.subr.mxu0 0.0
        %767 = vmatpush2.xpose.msra.mxu0 0.0
        %768 = vmatprep.subr.mxu0 0.0
        %769 = vmatpush2.xpose.msra.mxu0 0.0
        %770 = vmatprep.subr.mxu0 0.0
        %771 = vmatpush2.xpose.msra.mxu0 0.0
        %772 = vmatprep.subr.mxu0 0.0
        %773 = vmatpush2.xpose.msra.mxu0 0.0
        %774 = vmatprep.subr.mxu0 0.0
        %775 = vmatpush2.xpose.msra.mxu0 0.0
        %776 = vmatprep.subr.mxu0 0.0
        %777 = vmatpush2.xpose.msra.mxu0 0.0
        %778 = vmatprep.subr.mxu0 0.0
        %779 = vmatpush2.xpose.msra.mxu0 0.0
        %780 = vmatprep.subr.mxu0 0.0
        %781 = vmatpush2.xpose.msra.mxu0 0.0
        %782 = vmatprep.subr.mxu0 0.0
        %783 = vmatpush2.xpose.msra.mxu0 0.0
        %784 = vmatprep.subr.mxu0 0.0
        %785 = vmatpush2.xpose.msra.mxu0 0.0
        %786 = vmatprep.subr.mxu0 0.0
        %787 = vmatpush2.xpose.msra.mxu0 0.0
        %788 = vmatprep.subr.mxu0 0.0
        %789 = vmatpush2.xpose.msra.mxu0 0.0
        %790 = vmatprep.subr.mxu0 0.0
        %791 = vmatpush2.xpose.msra.mxu0 0.0
        %792 = vmatprep.subr.mxu0 0.0
        %793 = vmatpush2.xpose.msra.mxu0 0.0
        %794 = vmatprep.subr.mxu0 0.0
        %795 = vmatpush2.xpose.msra.mxu0 0.0
        %796 = vmatprep.mubr.f32.mxu0 0.0
        %797 = vmatmul.mubr.f32.gmra.mxu0 %v730
        %v798 = vpop.f32.mrf.mxu0
        %v799 = vadd.f32 0.0, %v798
        %v800 = vpop.f32.mrf.mxu0
        %801 = vdwg.mxu0
        %v802 = vlaneseq
        %v803 = vshrl.u32 %v802, 7
        %v804 = vsub.s32 0, %v803
        %v805 = vrot.slane %v726, %v804
        %v806 = vsub.f32 %v412, %v805
        %v807 = vsub.f32 %v413, %v805
        %v808 = vsub.f32 %v414, %v805
        %v809 = vsub.f32 %v415, %v805
        %v810 = vsub.f32 %v416, %v805
        %v811 = vsub.f32 %v417, %v805
        %v812 = vsub.f32 %v418, %v805
        %v813 = vsub.f32 %v419, %v805
        %v814 = vlaneseq
        %v815 = vshrl.u32 %v814, 7
        %v816 = vsub.s32 0, %v815
        %v817 = vrot.slane %v799, %v816
        %v818 = vmul.f32 %v806, %v817
        %v819 = vmul.f32 %v807, %v817
        %v820 = vmul.f32 %v808, %v817
        %v821 = vmul.f32 %v809, %v817
        %v822 = vmul.f32 %v810, %v817
        %v823 = vmul.f32 %v811, %v817
        %v824 = vmul.f32 %v812, %v817
        %v825 = vmul.f32 %v813, %v817
        %v826 = vld [vmem:[%s1] sm:$0x1]
        %v828 = vlaneseq
        %v829 = vshrl.u32 %v828, 7
        %v830 = vsub.s32 0, %v829
        %v831 = vrot.slane %v826, %v830
        %v833 = vmul.f32 %v818, %v831
        %v834 = vmul.f32 %v819, %v831
        %v835 = vmul.f32 %v820, %v831
        %v836 = vmul.f32 %v821, %v831
        %v837 = vmul.f32 %v822, %v831
        %v838 = vmul.f32 %v823, %v831
        %v839 = vmul.f32 %v824, %v831
        %v840 = vmul.f32 %v825, %v831
        %v841 = vld [vmem:[%s2] sm:$0x1]
        %v843 = vlaneseq
        %v844 = vshrl.u32 %v843, 7
        %v845 = vsub.s32 0, %v844
        %v846 = vrot.slane %v841, %v845
        %v848 = vadd.f32 %v833, %v846
        %v849 = vadd.f32 %v834, %v846
        %v850 = vadd.f32 %v835, %v846
        %v851 = vadd.f32 %v836, %v846
        %v852 = vadd.f32 %v837, %v846
        %v853 = vadd.f32 %v838, %v846
        %v854 = vadd.f32 %v839, %v846
        %v855 = vadd.f32 %v840, %v846
        %v856 = vld [vmem:[%s4] sm:$0xff]
        %v857 = vld [vmem:[%s4 + $0x8] sm:$0xff]
        %v858 = vld [vmem:[%s4 + $0x10] sm:$0xff]
        %v859 = vld [vmem:[%s4 + $0x18] sm:$0xff]
        %v860 = vld [vmem:[%s4 + $0x20] sm:$0xff]
        %v861 = vld [vmem:[%s4 + $0x28] sm:$0xff]
        %v862 = vld [vmem:[%s4 + $0x30] sm:$0xff]
        %v863 = vld [vmem:[%s4 + $0x38] sm:$0xff]
        %v864 = vld [vmem:[%s7] sm:$0x1]
        %v866 = vlaneseq
        %v867 = vshrl.u32 %v866, 7
        %v868 = vsub.s32 0, %v867
        %v869 = vrot.slane %v864, %v868
        %v872 = vsel %vm428, %v848, 0
        %v875 = vsel %vm428, %v849, 0
        %v878 = vsel %vm428, %v850, 0
        %v881 = vsel %vm428, %v851, 0
        %v884 = vsel %vm428, %v852, 0
        %v887 = vsel %vm428, %v853, 0
        %v890 = vsel %vm428, %v854, 0
        %v893 = vsel %vm428, %v855, 0
        %895 = vmatprep.subr.mxu0 0.0
        %896 = vmatpush1.msra.mxu0 0.0
        %897 = vmatprep.subr.mxu0 0.0
        %898 = vmatpush1.msra.mxu0 0.0
        %899 = vmatprep.subr.mxu0 0.0
        %900 = vmatpush1.msra.mxu0 0.0
        %901 = vmatprep.subr.mxu0 0.0
        %902 = vmatpush1.msra.mxu0 0.0
        %903 = vmatprep.subr.mxu0 0.0
        %904 = vmatpush1.msra.mxu0 0.0
        %905 = vmatprep.subr.mxu0 0.0
        %906 = vmatpush1.msra.mxu0 0.0
        %907 = vmatprep.subr.mxu0 0.0
        %908 = vmatpush1.msra.mxu0 0.0
        %909 = vmatprep.subr.mxu0 0.0
        %910 = vmatpush1.msra.mxu0 0.0
        %911 = vmatprep.subr.mxu0 0.0
        %912 = vmatpush1.msra.mxu0 %v863
        %913 = vmatprep.subr.mxu0 0.0
        %914 = vmatpush1.msra.mxu0 %v862
        %915 = vmatprep.subr.mxu0 0.0
        %916 = vmatpush1.msra.mxu0 %v861
        %917 = vmatprep.subr.mxu0 0.0
        %918 = vmatpush1.msra.mxu0 %v860
        %919 = vmatprep.subr.mxu0 0.0
        %920 = vmatpush1.msra.mxu0 %v859
        %921 = vmatprep.subr.mxu0 0.0
        %922 = vmatpush1.msra.mxu0 %v858
        %923 = vmatprep.subr.mxu0 0.0
        %924 = vmatpush1.msra.mxu0 %v857
        %925 = vmatprep.subr.mxu0 0.0
        %926 = vmatpush1.msra.mxu0 %v856
        %927 = vmatprep.subr.mxu0 0.0
        %928 = vmatpush2.msra.mxu0 0.0
        %929 = vmatprep.subr.mxu0 0.0
        %930 = vmatpush2.msra.mxu0 0.0
        %931 = vmatprep.subr.mxu0 0.0
        %932 = vmatpush2.msra.mxu0 0.0
        %933 = vmatprep.subr.mxu0 0.0
        %934 = vmatpush2.msra.mxu0 0.0
        %935 = vmatprep.subr.mxu0 0.0
        %936 = vmatpush2.msra.mxu0 0.0
        %937 = vmatprep.subr.mxu0 0.0
        %938 = vmatpush2.msra.mxu0 0.0
        %939 = vmatprep.subr.mxu0 0.0
        %940 = vmatpush2.msra.mxu0 0.0
        %941 = vmatprep.subr.mxu0 0.0
        %942 = vmatpush2.msra.mxu0 0.0
        %943 = vmatprep.subr.mxu0 0.0
        %944 = vmatpush2.msra.mxu0 0.0
        %945 = vmatprep.subr.mxu0 0.0
        %946 = vmatpush2.msra.mxu0 0.0
        %947 = vmatprep.subr.mxu0 0.0
        %948 = vmatpush2.msra.mxu0 0.0
        %949 = vmatprep.subr.mxu0 0.0
        %950 = vmatpush2.msra.mxu0 0.0
        %951 = vmatprep.subr.mxu0 0.0
        %952 = vmatpush2.msra.mxu0 0.0
        %953 = vmatprep.subr.mxu0 0.0
        %954 = vmatpush2.msra.mxu0 0.0
        %955 = vmatprep.subr.mxu0 0.0
        %956 = vmatpush2.msra.mxu0 0.0
        %957 = vmatprep.subr.mxu0 0.0
        %958 = vmatpush2.msra.mxu0 0.0
        %959 = vmatprep.mubr.f32.mxu0 0.0
        %960 = vmatmul.mubr.f32.gmra.mxu0 %v872
        %v961 = vpop.f32.mrf.mxu0
        %v962 = vadd.f32 %v869, %v961
        %v963 = vpop.f32.mrf.mxu0
        %964 = vmatprep.mubr.f32.mxu0 0.0
        %965 = vmatmul.mubr.f32.gmra.mxu0 %v875
        %v966 = vpop.f32.mrf.mxu0
        %v967 = vadd.f32 %v869, %v966
        %v968 = vpop.f32.mrf.mxu0
        %969 = vmatprep.mubr.f32.mxu0 0.0
        %970 = vmatmul.mubr.f32.gmra.mxu0 %v878
        %v971 = vpop.f32.mrf.mxu0
        %v972 = vadd.f32 %v869, %v971
        %v973 = vpop.f32.mrf.mxu0
        %974 = vmatprep.mubr.f32.mxu0 0.0
        %975 = vmatmul.mubr.f32.gmra.mxu0 %v881
        %v976 = vpop.f32.mrf.mxu0
        %v977 = vadd.f32 %v869, %v976
        %v978 = vpop.f32.mrf.mxu0
        %979 = vmatprep.mubr.f32.mxu0 0.0
        %980 = vmatmul.mubr.f32.gmra.mxu0 %v884
        %v981 = vpop.f32.mrf.mxu0
        %v982 = vadd.f32 %v869, %v981
        %v983 = vpop.f32.mrf.mxu0
        %984 = vmatprep.mubr.f32.mxu0 0.0
        %985 = vmatmul.mubr.f32.gmra.mxu0 %v887
        %v986 = vpop.f32.mrf.mxu0
        %v987 = vadd.f32 %v869, %v986
        %v988 = vpop.f32.mrf.mxu0
        %989 = vmatprep.mubr.f32.mxu0 0.0
        %990 = vmatmul.mubr.f32.gmra.mxu0 %v890
        %v991 = vpop.f32.mrf.mxu0
        %v992 = vadd.f32 %v869, %v991
        %v993 = vpop.f32.mrf.mxu0
        %994 = vmatprep.mubr.f32.mxu0 0.0
        %995 = vmatmul.mubr.f32.gmra.mxu0 %v893
        %v996 = vpop.f32.mrf.mxu0
        %v997 = vadd.f32 %v869, %v996
        %v998 = vpop.f32.mrf.mxu0
        %999 = vdwg.mxu0
        %v1000 = vmul.f32 %v962, 0.17677669
        %v1001 = vmul.f32 %v967, 0.17677669
        %v1002 = vmul.f32 %v972, 0.17677669
        %v1003 = vmul.f32 %v977, 0.17677669
        %v1004 = vmul.f32 %v982, 0.17677669
        %v1005 = vmul.f32 %v987, 0.17677669
        %v1006 = vmul.f32 %v992, 0.17677669
        %v1007 = vmul.f32 %v997, 0.17677669
        %v1008 = vld [vmem:[%s5] sm:$0xff]
        %v1009 = vld [vmem:[%s5 + $0x8] sm:$0xff]
        %v1010 = vld [vmem:[%s5 + $0x10] sm:$0xff]
        %v1011 = vld [vmem:[%s5 + $0x18] sm:$0xff]
        %v1012 = vld [vmem:[%s5 + $0x20] sm:$0xff]
        %v1013 = vld [vmem:[%s5 + $0x28] sm:$0xff]
        %v1014 = vld [vmem:[%s5 + $0x30] sm:$0xff]
        %v1015 = vld [vmem:[%s5 + $0x38] sm:$0xff]
        %v1016 = vld [vmem:[%s8] sm:$0x1]
        %v1018 = vlaneseq
        %v1019 = vshrl.u32 %v1018, 7
        %v1020 = vsub.s32 0, %v1019
        %v1021 = vrot.slane %v1016, %v1020
        %1023 = vmatprep.subr.mxu0 0.0
        %1024 = vmatpush1.msra.mxu0 0.0
        %1025 = vmatprep.subr.mxu0 0.0
        %1026 = vmatpush1.msra.mxu0 0.0
        %1027 = vmatprep.subr.mxu0 0.0
        %1028 = vmatpush1.msra.mxu0 0.0
        %1029 = vmatprep.subr.mxu0 0.0
        %1030 = vmatpush1.msra.mxu0 0.0
        %1031 = vmatprep.subr.mxu0 0.0
        %1032 = vmatpush1.msra.mxu0 0.0
        %1033 = vmatprep.subr.mxu0 0.0
        %1034 = vmatpush1.msra.mxu0 0.0
        %1035 = vmatprep.subr.mxu0 0.0
        %1036 = vmatpush1.msra.mxu0 0.0
        %1037 = vmatprep.subr.mxu0 0.0
        %1038 = vmatpush1.msra.mxu0 0.0
        %1039 = vmatprep.subr.mxu0 0.0
        %1040 = vmatpush1.msra.mxu0 %v1015
        %1041 = vmatprep.subr.mxu0 0.0
        %1042 = vmatpush1.msra.mxu0 %v1014
        %1043 = vmatprep.subr.mxu0 0.0
        %1044 = vmatpush1.msra.mxu0 %v1013
        %1045 = vmatprep.subr.mxu0 0.0
        %1046 = vmatpush1.msra.mxu0 %v1012
        %1047 = vmatprep.subr.mxu0 0.0
        %1048 = vmatpush1.msra.mxu0 %v1011
        %1049 = vmatprep.subr.mxu0 0.0
        %1050 = vmatpush1.msra.mxu0 %v1010
        %1051 = vmatprep.subr.mxu0 0.0
        %1052 = vmatpush1.msra.mxu0 %v1009
        %1053 = vmatprep.subr.mxu0 0.0
        %1054 = vmatpush1.msra.mxu0 %v1008
        %1055 = vmatprep.subr.mxu0 0.0
        %1056 = vmatpush2.msra.mxu0 0.0
        %1057 = vmatprep.subr.mxu0 0.0
        %1058 = vmatpush2.msra.mxu0 0.0
        %1059 = vmatprep.subr.mxu0 0.0
        %1060 = vmatpush2.msra.mxu0 0.0
        %1061 = vmatprep.subr.mxu0 0.0
        %1062 = vmatpush2.msra.mxu0 0.0
        %1063 = vmatprep.subr.mxu0 0.0
        %1064 = vmatpush2.msra.mxu0 0.0
        %1065 = vmatprep.subr.mxu0 0.0
        %1066 = vmatpush2.msra.mxu0 0.0
        %1067 = vmatprep.subr.mxu0 0.0
        %1068 = vmatpush2.msra.mxu0 0.0
        %1069 = vmatprep.subr.mxu0 0.0
        %1070 = vmatpush2.msra.mxu0 0.0
        %1071 = vmatprep.subr.mxu0 0.0
        %1072 = vmatpush2.msra.mxu0 0.0
        %1073 = vmatprep.subr.mxu0 0.0
        %1074 = vmatpush2.msra.mxu0 0.0
        %1075 = vmatprep.subr.mxu0 0.0
        %1076 = vmatpush2.msra.mxu0 0.0
        %1077 = vmatprep.subr.mxu0 0.0
        %1078 = vmatpush2.msra.mxu0 0.0
        %1079 = vmatprep.subr.mxu0 0.0
        %1080 = vmatpush2.msra.mxu0 0.0
        %1081 = vmatprep.subr.mxu0 0.0
        %1082 = vmatpush2.msra.mxu0 0.0
        %1083 = vmatprep.subr.mxu0 0.0
        %1084 = vmatpush2.msra.mxu0 0.0
        %1085 = vmatprep.subr.mxu0 0.0
        %1086 = vmatpush2.msra.mxu0 0.0
        %1087 = vmatprep.mubr.f32.mxu0 0.0
        %1088 = vmatmul.mubr.f32.gmra.mxu0 %v872
        %v1089 = vpop.f32.mrf.mxu0
        %v1090 = vadd.f32 %v1021, %v1089
        %v1091 = vpop.f32.mrf.mxu0
        %1092 = vmatprep.mubr.f32.mxu0 0.0
        %1093 = vmatmul.mubr.f32.gmra.mxu0 %v875
        %v1094 = vpop.f32.mrf.mxu0
        %v1095 = vadd.f32 %v1021, %v1094
        %v1096 = vpop.f32.mrf.mxu0
        %1097 = vmatprep.mubr.f32.mxu0 0.0
        %1098 = vmatmul.mubr.f32.gmra.mxu0 %v878
        %v1099 = vpop.f32.mrf.mxu0
        %v1100 = vadd.f32 %v1021, %v1099
        %v1101 = vpop.f32.mrf.mxu0
        %1102 = vmatprep.mubr.f32.mxu0 0.0
        %1103 = vmatmul.mubr.f32.gmra.mxu0 %v881
        %v1104 = vpop.f32.mrf.mxu0
        %v1105 = vadd.f32 %v1021, %v1104
        %v1106 = vpop.f32.mrf.mxu0
        %1107 = vmatprep.mubr.f32.mxu0 0.0
        %1108 = vmatmul.mubr.f32.gmra.mxu0 %v884
        %v1109 = vpop.f32.mrf.mxu0
        %v1110 = vadd.f32 %v1021, %v1109
        %v1111 = vpop.f32.mrf.mxu0
        %1112 = vmatprep.mubr.f32.mxu0 0.0
        %1113 = vmatmul.mubr.f32.gmra.mxu0 %v887
        %v1114 = vpop.f32.mrf.mxu0
        %v1115 = vadd.f32 %v1021, %v1114
        %v1116 = vpop.f32.mrf.mxu0
        %1117 = vmatprep.mubr.f32.mxu0 0.0
        %1118 = vmatmul.mubr.f32.gmra.mxu0 %v890
        %v1119 = vpop.f32.mrf.mxu0
        %v1120 = vadd.f32 %v1021, %v1119
        %v1121 = vpop.f32.mrf.mxu0
        %1122 = vmatprep.mubr.f32.mxu0 0.0
        %1123 = vmatmul.mubr.f32.gmra.mxu0 %v893
        %v1124 = vpop.f32.mrf.mxu0
        %v1125 = vadd.f32 %v1021, %v1124
        %v1126 = vpop.f32.mrf.mxu0
        %1127 = vdwg.mxu0
        %v1128 = vld [vmem:[%s6] sm:$0xff]
        %v1129 = vld [vmem:[%s6 + $0x8] sm:$0xff]
        %v1130 = vld [vmem:[%s6 + $0x10] sm:$0xff]
        %v1131 = vld [vmem:[%s6 + $0x18] sm:$0xff]
        %v1132 = vld [vmem:[%s6 + $0x20] sm:$0xff]
        %v1133 = vld [vmem:[%s6 + $0x28] sm:$0xff]
        %v1134 = vld [vmem:[%s6 + $0x30] sm:$0xff]
        %v1135 = vld [vmem:[%s6 + $0x38] sm:$0xff]
        %v1136 = vld [vmem:[%s9] sm:$0x1]
        %v1138 = vlaneseq
        %v1139 = vshrl.u32 %v1138, 7
        %v1140 = vsub.s32 0, %v1139
        %v1141 = vrot.slane %v1136, %v1140
        %1143 = vmatprep.subr.mxu0 0.0
        %1144 = vmatpush1.msra.mxu0 0.0
        %1145 = vmatprep.subr.mxu0 0.0
        %1146 = vmatpush1.msra.mxu0 0.0
        %1147 = vmatprep.subr.mxu0 0.0
        %1148 = vmatpush1.msra.mxu0 0.0
        %1149 = vmatprep.subr.mxu0 0.0
        %1150 = vmatpush1.msra.mxu0 0.0
        %1151 = vmatprep.subr.mxu0 0.0
        %1152 = vmatpush1.msra.mxu0 0.0
        %1153 = vmatprep.subr.mxu0 0.0
        %1154 = vmatpush1.msra.mxu0 0.0
        %1155 = vmatprep.subr.mxu0 0.0
        %1156 = vmatpush1.msra.mxu0 0.0
        %1157 = vmatprep.subr.mxu0 0.0
        %1158 = vmatpush1.msra.mxu0 0.0
        %1159 = vmatprep.subr.mxu0 0.0
        %1160 = vmatpush1.msra.mxu0 %v1135
        %1161 = vmatprep.subr.mxu0 0.0
        %1162 = vmatpush1.msra.mxu0 %v1134
        %1163 = vmatprep.subr.mxu0 0.0
        %1164 = vmatpush1.msra.mxu0 %v1133
        %1165 = vmatprep.subr.mxu0 0.0
        %1166 = vmatpush1.msra.mxu0 %v1132
        %1167 = vmatprep.subr.mxu0 0.0
        %1168 = vmatpush1.msra.mxu0 %v1131
        %1169 = vmatprep.subr.mxu0 0.0
        %1170 = vmatpush1.msra.mxu0 %v1130
        %1171 = vmatprep.subr.mxu0 0.0
        %1172 = vmatpush1.msra.mxu0 %v1129
        %1173 = vmatprep.subr.mxu0 0.0
        %1174 = vmatpush1.msra.mxu0 %v1128
        %1175 = vmatprep.subr.mxu0 0.0
        %1176 = vmatpush2.msra.mxu0 0.0
        %1177 = vmatprep.subr.mxu0 0.0
        %1178 = vmatpush2.msra.mxu0 0.0
        %1179 = vmatprep.subr.mxu0 0.0
        %1180 = vmatpush2.msra.mxu0 0.0
        %1181 = vmatprep.subr.mxu0 0.0
        %1182 = vmatpush2.msra.mxu0 0.0
        %1183 = vmatprep.subr.mxu0 0.0
        %1184 = vmatpush2.msra.mxu0 0.0
        %1185 = vmatprep.subr.mxu0 0.0
        %1186 = vmatpush2.msra.mxu0 0.0
        %1187 = vmatprep.subr.mxu0 0.0
        %1188 = vmatpush2.msra.mxu0 0.0
        %1189 = vmatprep.subr.mxu0 0.0
        %1190 = vmatpush2.msra.mxu0 0.0
        %1191 = vmatprep.subr.mxu0 0.0
        %1192 = vmatpush2.msra.mxu0 0.0
        %1193 = vmatprep.subr.mxu0 0.0
        %1194 = vmatpush2.msra.mxu0 0.0
        %1195 = vmatprep.subr.mxu0 0.0
        %1196 = vmatpush2.msra.mxu0 0.0
        %1197 = vmatprep.subr.mxu0 0.0
        %1198 = vmatpush2.msra.mxu0 0.0
        %1199 = vmatprep.subr.mxu0 0.0
        %1200 = vmatpush2.msra.mxu0 0.0
        %1201 = vmatprep.subr.mxu0 0.0
        %1202 = vmatpush2.msra.mxu0 0.0
        %1203 = vmatprep.subr.mxu0 0.0
        %1204 = vmatpush2.msra.mxu0 0.0
        %1205 = vmatprep.subr.mxu0 0.0
        %1206 = vmatpush2.msra.mxu0 0.0
        %1207 = vmatprep.mubr.f32.mxu0 0.0
        %1208 = vmatmul.mubr.f32.gmra.mxu0 %v872
        %v1209 = vpop.f32.mrf.mxu0
        %v1210 = vadd.f32 %v1141, %v1209
        %v1211 = vpop.f32.mrf.mxu0
        %1212 = vmatprep.mubr.f32.mxu0 0.0
        %1213 = vmatmul.mubr.f32.gmra.mxu0 %v875
        %v1214 = vpop.f32.mrf.mxu0
        %v1215 = vadd.f32 %v1141, %v1214
        %v1216 = vpop.f32.mrf.mxu0
        %1217 = vmatprep.mubr.f32.mxu0 0.0
        %1218 = vmatmul.mubr.f32.gmra.mxu0 %v878
        %v1219 = vpop.f32.mrf.mxu0
        %v1220 = vadd.f32 %v1141, %v1219
        %v1221 = vpop.f32.mrf.mxu0
        %1222 = vmatprep.mubr.f32.mxu0 0.0
        %1223 = vmatmul.mubr.f32.gmra.mxu0 %v881
        %v1224 = vpop.f32.mrf.mxu0
        %v1225 = vadd.f32 %v1141, %v1224
        %v1226 = vpop.f32.mrf.mxu0
        %1227 = vmatprep.mubr.f32.mxu0 0.0
        %1228 = vmatmul.mubr.f32.gmra.mxu0 %v884
        %v1229 = vpop.f32.mrf.mxu0
        %v1230 = vadd.f32 %v1141, %v1229
        %v1231 = vpop.f32.mrf.mxu0
        %1232 = vmatprep.mubr.f32.mxu0 0.0
        %1233 = vmatmul.mubr.f32.gmra.mxu0 %v887
        %v1234 = vpop.f32.mrf.mxu0
        %v1235 = vadd.f32 %v1141, %v1234
        %v1236 = vpop.f32.mrf.mxu0
        %1237 = vmatprep.mubr.f32.mxu0 0.0
        %1238 = vmatmul.mubr.f32.gmra.mxu0 %v890
        %v1239 = vpop.f32.mrf.mxu0
        %v1240 = vadd.f32 %v1141, %v1239
        %v1241 = vpop.f32.mrf.mxu0
        %1242 = vmatprep.mubr.f32.mxu0 0.0
        %1243 = vmatmul.mubr.f32.gmra.mxu0 %v893
        %v1244 = vpop.f32.mrf.mxu0
        %v1245 = vadd.f32 %v1141, %v1244
        %v1246 = vpop.f32.mrf.mxu0
        %1247 = vdwg.mxu0
        %v1249 = vsel %vm631, %v1000, 0
        %v1252 = vsel %vm631, %v1001, 0
        %v1255 = vsel %vm631, %v1002, 0
        %v1258 = vsel %vm631, %v1003, 0
        %v1261 = vsel %vm631, %v1004, 0
        %v1264 = vsel %vm631, %v1005, 0
        %v1267 = vsel %vm631, %v1006, 0
        %v1270 = vsel %vm631, %v1007, 0
        %v1273 = vsel %vm631, %v1090, 0
        %v1276 = vsel %vm631, %v1095, 0
        %v1279 = vsel %vm631, %v1100, 0
        %v1282 = vsel %vm631, %v1105, 0
        %v1285 = vsel %vm631, %v1110, 0
        %v1288 = vsel %vm631, %v1115, 0
        %v1291 = vsel %vm631, %v1120, 0
        %v1294 = vsel %vm631, %v1125, 0
        %1296 = vmatprep.subr.mxu0 0.0
        %1297 = vmatpush1.xpose.msra.mxu0 0.0
        %1298 = vmatprep.subr.mxu0 0.0
        %1299 = vmatpush1.xpose.msra.mxu0 0.0
        %1300 = vmatprep.subr.mxu0 0.0
        %1301 = vmatpush1.xpose.msra.mxu0 0.0
        %1302 = vmatprep.subr.mxu0 0.0
        %1303 = vmatpush1.xpose.msra.mxu0 0.0
        %1304 = vmatprep.subr.mxu0 0.0
        %1305 = vmatpush1.xpose.msra.mxu0 0.0
        %1306 = vmatprep.subr.mxu0 0.0
        %1307 = vmatpush1.xpose.msra.mxu0 0.0
        %1308 = vmatprep.subr.mxu0 0.0
        %1309 = vmatpush1.xpose.msra.mxu0 0.0
        %1310 = vmatprep.subr.mxu0 0.0
        %1311 = vmatpush1.xpose.msra.mxu0 0.0
        %1312 = vmatprep.subr.mxu0 0.0
        %1313 = vmatpush1.xpose.msra.mxu0 %v1294
        %1314 = vmatprep.subr.mxu0 0.0
        %1315 = vmatpush1.xpose.msra.mxu0 %v1291
        %1316 = vmatprep.subr.mxu0 0.0
        %1317 = vmatpush1.xpose.msra.mxu0 %v1288
        %1318 = vmatprep.subr.mxu0 0.0
        %1319 = vmatpush1.xpose.msra.mxu0 %v1285
        %1320 = vmatprep.subr.mxu0 0.0
        %1321 = vmatpush1.xpose.msra.mxu0 %v1282
        %1322 = vmatprep.subr.mxu0 0.0
        %1323 = vmatpush1.xpose.msra.mxu0 %v1279
        %1324 = vmatprep.subr.mxu0 0.0
        %1325 = vmatpush1.xpose.msra.mxu0 %v1276
        %1326 = vmatprep.subr.mxu0 0.0
        %1327 = vmatpush1.xpose.msra.mxu0 %v1273
        %1328 = vmatprep.subr.mxu0 0.0
        %1329 = vmatpush2.xpose.msra.mxu0 0.0
        %1330 = vmatprep.subr.mxu0 0.0
        %1331 = vmatpush2.xpose.msra.mxu0 0.0
        %1332 = vmatprep.subr.mxu0 0.0
        %1333 = vmatpush2.xpose.msra.mxu0 0.0
        %1334 = vmatprep.subr.mxu0 0.0
        %1335 = vmatpush2.xpose.msra.mxu0 0.0
        %1336 = vmatprep.subr.mxu0 0.0
        %1337 = vmatpush2.xpose.msra.mxu0 0.0
        %1338 = vmatprep.subr.mxu0 0.0
        %1339 = vmatpush2.xpose.msra.mxu0 0.0
        %1340 = vmatprep.subr.mxu0 0.0
        %1341 = vmatpush2.xpose.msra.mxu0 0.0
        %1342 = vmatprep.subr.mxu0 0.0
        %1343 = vmatpush2.xpose.msra.mxu0 0.0
        %1344 = vmatprep.subr.mxu0 0.0
        %1345 = vmatpush2.xpose.msra.mxu0 0.0
        %1346 = vmatprep.subr.mxu0 0.0
        %1347 = vmatpush2.xpose.msra.mxu0 0.0
        %1348 = vmatprep.subr.mxu0 0.0
        %1349 = vmatpush2.xpose.msra.mxu0 0.0
        %1350 = vmatprep.subr.mxu0 0.0
        %1351 = vmatpush2.xpose.msra.mxu0 0.0
        %1352 = vmatprep.subr.mxu0 0.0
        %1353 = vmatpush2.xpose.msra.mxu0 0.0
        %1354 = vmatprep.subr.mxu0 0.0
        %1355 = vmatpush2.xpose.msra.mxu0 0.0
        %1356 = vmatprep.subr.mxu0 0.0
        %1357 = vmatpush2.xpose.msra.mxu0 0.0
        %1358 = vmatprep.subr.mxu0 0.0
        %1359 = vmatpush2.xpose.msra.mxu0 0.0
        %1360 = vmatprep.mubr.f32.mxu0 0.0
        %1361 = vmatmul.mubr.f32.gmra.mxu0 %v1249
        %v1362 = vpop.f32.mrf.mxu0
        %v1363 = vadd.f32 0.0, %v1362
        %v1364 = vpop.f32.mrf.mxu0
        %1365 = vmatprep.mubr.f32.mxu0 0.0
        %1366 = vmatmul.mubr.f32.gmra.mxu0 %v1252
        %v1367 = vpop.f32.mrf.mxu0
        %v1368 = vadd.f32 0.0, %v1367
        %v1369 = vpop.f32.mrf.mxu0
        %1370 = vmatprep.mubr.f32.mxu0 0.0
        %1371 = vmatmul.mubr.f32.gmra.mxu0 %v1255
        %v1372 = vpop.f32.mrf.mxu0
        %v1373 = vadd.f32 0.0, %v1372
        %v1374 = vpop.f32.mrf.mxu0
        %1375 = vmatprep.mubr.f32.mxu0 0.0
        %1376 = vmatmul.mubr.f32.gmra.mxu0 %v1258
        %v1377 = vpop.f32.mrf.mxu0
        %v1378 = vadd.f32 0.0, %v1377
        %v1379 = vpop.f32.mrf.mxu0
        %1380 = vmatprep.mubr.f32.mxu0 0.0
        %1381 = vmatmul.mubr.f32.gmra.mxu0 %v1261
        %v1382 = vpop.f32.mrf.mxu0
        %v1383 = vadd.f32 0.0, %v1382
        %v1384 = vpop.f32.mrf.mxu0
        %1385 = vmatprep.mubr.f32.mxu0 0.0
        %1386 = vmatmul.mubr.f32.gmra.mxu0 %v1264
        %v1387 = vpop.f32.mrf.mxu0
        %v1388 = vadd.f32 0.0, %v1387
        %v1389 = vpop.f32.mrf.mxu0
        %1390 = vmatprep.mubr.f32.mxu0 0.0
        %1391 = vmatmul.mubr.f32.gmra.mxu0 %v1267
        %v1392 = vpop.f32.mrf.mxu0
        %v1393 = vadd.f32 0.0, %v1392
        %v1394 = vpop.f32.mrf.mxu0
        %1395 = vmatprep.mubr.f32.mxu0 0.0
        %1396 = vmatmul.mubr.f32.gmra.mxu0 %v1270
        %v1397 = vpop.f32.mrf.mxu0
        %v1398 = vadd.f32 0.0, %v1397
        %v1399 = vpop.f32.mrf.mxu0
        %1400 = vdwg.mxu0
        %v1401 = vsel %vm428, %v1363, -inf
        %1402 = vmax.xlane.f32.xlu0 %v1401
        %v1403 = vpop.xlane.xlu0 %1402
        %v1404 = vsel %vm428, %v1368, -inf
        %1405 = vmax.xlane.f32.xlu0 %v1404
        %v1406 = vpop.xlane.xlu0 %1405
        %v1407 = vsel %vm428, %v1373, -inf
        %1408 = vmax.xlane.f32.xlu0 %v1407
        %v1409 = vpop.xlane.xlu0 %1408
        %v1410 = vsel %vm428, %v1378, -inf
        %1411 = vmax.xlane.f32.xlu0 %v1410
        %v1412 = vpop.xlane.xlu0 %1411
        %v1413 = vsel %vm428, %v1383, -inf
        %1414 = vmax.xlane.f32.xlu0 %v1413
        %v1415 = vpop.xlane.xlu0 %1414
        %v1416 = vsel %vm428, %v1388, -inf
        %1417 = vmax.xlane.f32.xlu0 %v1416
        %v1418 = vpop.xlane.xlu0 %1417
        %v1419 = vsel %vm428, %v1393, -inf
        %1420 = vmax.xlane.f32.xlu0 %v1419
        %v1421 = vpop.xlane.xlu0 %1420
        %v1422 = vsel %vm428, %v1398, -inf
        %1423 = vmax.xlane.f32.xlu0 %v1422
        %v1424 = vpop.xlane.xlu0 %1423
        %v1425 = vsub.f32 %v1363, %v1403
        %v1426 = vsub.f32 %v1368, %v1406
        %v1427 = vsub.f32 %v1373, %v1409
        %v1428 = vsub.f32 %v1378, %v1412
        %v1429 = vsub.f32 %v1383, %v1415
        %v1430 = vsub.f32 %v1388, %v1418
        %v1431 = vsub.f32 %v1393, %v1421
        %v1432 = vsub.f32 %v1398, %v1424
        %v1433 = vmul.f32 %v1425, 1.442695
        %v1434 = vpow.pop %v1433
        %v1435 = vmul.f32 %v1426, 1.442695
        %v1436 = vpow.pop %v1435
        %v1437 = vmul.f32 %v1427, 1.442695
        %v1438 = vpow.pop %v1437
        %v1439 = vmul.f32 %v1428, 1.442695
        %v1440 = vpow.pop %v1439
        %v1441 = vmul.f32 %v1429, 1.442695
        %v1442 = vpow.pop %v1441
        %v1443 = vmul.f32 %v1430, 1.442695
        %v1444 = vpow.pop %v1443
        %v1445 = vmul.f32 %v1431, 1.442695
        %v1446 = vpow.pop %v1445
        %v1447 = vmul.f32 %v1432, 1.442695
        %v1448 = vpow.pop %v1447
        %v1449 = vsel %vm428, %v1434, 0.0
        %1450 = vadd.xlane.f32.xlu0 %v1449
        %v1451 = vpop.xlane.xlu0 %1450
        %v1452 = vsel %vm428, %v1436, 0.0
        %1453 = vadd.xlane.f32.xlu0 %v1452
        %v1454 = vpop.xlane.xlu0 %1453
        %v1455 = vsel %vm428, %v1438, 0.0
        %1456 = vadd.xlane.f32.xlu0 %v1455
        %v1457 = vpop.xlane.xlu0 %1456
        %v1458 = vsel %vm428, %v1440, 0.0
        %1459 = vadd.xlane.f32.xlu0 %v1458
        %v1460 = vpop.xlane.xlu0 %1459
        %v1461 = vsel %vm428, %v1442, 0.0
        %1462 = vadd.xlane.f32.xlu0 %v1461
        %v1463 = vpop.xlane.xlu0 %1462
        %v1464 = vsel %vm428, %v1444, 0.0
        %1465 = vadd.xlane.f32.xlu0 %v1464
        %v1466 = vpop.xlane.xlu0 %1465
        %v1467 = vsel %vm428, %v1446, 0.0
        %1468 = vadd.xlane.f32.xlu0 %v1467
        %v1469 = vpop.xlane.xlu0 %1468
        %v1470 = vsel %vm428, %v1448, 0.0
        %1471 = vadd.xlane.f32.xlu0 %v1470
        %v1472 = vpop.xlane.xlu0 %1471
        %v1473 = vrcp.pop %v1451
        %v1474 = vrcp.pop %v1454
        %v1475 = vrcp.pop %v1457
        %v1476 = vrcp.pop %v1460
        %v1477 = vrcp.pop %v1463
        %v1478 = vrcp.pop %v1466
        %v1479 = vrcp.pop %v1469
        %v1480 = vrcp.pop %v1472
        %v1481 = vmul.f32 %v1434, %v1473
        %v1482 = vmul.f32 %v1436, %v1474
        %v1483 = vmul.f32 %v1438, %v1475
        %v1484 = vmul.f32 %v1440, %v1476
        %v1485 = vmul.f32 %v1442, %v1477
        %v1486 = vmul.f32 %v1444, %v1478
        %v1487 = vmul.f32 %v1446, %v1479
        %v1488 = vmul.f32 %v1448, %v1480
        %v1490 = vsel %vm428, %v1481, 0
        %v1493 = vsel %vm428, %v1482, 0
        %v1496 = vsel %vm428, %v1483, 0
        %v1499 = vsel %vm428, %v1484, 0
        %v1502 = vsel %vm428, %v1485, 0
        %v1505 = vsel %vm428, %v1486, 0
        %v1508 = vsel %vm428, %v1487, 0
        %v1511 = vsel %vm428, %v1488, 0
        %1513 = vmatprep.subr.mxu0 0.0
        %1514 = vmatpush1.msra.mxu0 0.0
        %1515 = vmatprep.subr.mxu0 0.0
        %1516 = vmatpush1.msra.mxu0 0.0
        %1517 = vmatprep.subr.mxu0 0.0
        %1518 = vmatpush1.msra.mxu0 0.0
        %1519 = vmatprep.subr.mxu0 0.0
        %1520 = vmatpush1.msra.mxu0 0.0
        %1521 = vmatprep.subr.mxu0 0.0
        %1522 = vmatpush1.msra.mxu0 0.0
        %1523 = vmatprep.subr.mxu0 0.0
        %1524 = vmatpush1.msra.mxu0 0.0
        %1525 = vmatprep.subr.mxu0 0.0
        %1526 = vmatpush1.msra.mxu0 0.0
        %1527 = vmatprep.subr.mxu0 0.0
        %1528 = vmatpush1.msra.mxu0 0.0
        %1529 = vmatprep.subr.mxu0 0.0
        %1530 = vmatpush1.msra.mxu0 %v1245
        %1531 = vmatprep.subr.mxu0 0.0
        %1532 = vmatpush1.msra.mxu0 %v1240
        %1533 = vmatprep.subr.mxu0 0.0
        %1534 = vmatpush1.msra.mxu0 %v1235
        %1535 = vmatprep.subr.mxu0 0.0
        %1536 = vmatpush1.msra.mxu0 %v1230
        %1537 = vmatprep.subr.mxu0 0.0
        %1538 = vmatpush1.msra.mxu0 %v1225
        %1539 = vmatprep.subr.mxu0 0.0
        %1540 = vmatpush1.msra.mxu0 %v1220
        %1541 = vmatprep.subr.mxu0 0.0
        %1542 = vmatpush1.msra.mxu0 %v1215
        %1543 = vmatprep.subr.mxu0 0.0
        %1544 = vmatpush1.msra.mxu0 %v1210
        %1545 = vmatprep.subr.mxu0 0.0
        %1546 = vmatpush2.msra.mxu0 0.0
        %1547 = vmatprep.subr.mxu0 0.0
        %1548 = vmatpush2.msra.mxu0 0.0
        %1549 = vmatprep.subr.mxu0 0.0
        %1550 = vmatpush2.msra.mxu0 0.0
        %1551 = vmatprep.subr.mxu0 0.0
        %1552 = vmatpush2.msra.mxu0 0.0
        %1553 = vmatprep.subr.mxu0 0.0
        %1554 = vmatpush2.msra.mxu0 0.0
        %1555 = vmatprep.subr.mxu0 0.0
        %1556 = vmatpush2.msra.mxu0 0.0
        %1557 = vmatprep.subr.mxu0 0.0
        %1558 = vmatpush2.msra.mxu0 0.0
        %1559 = vmatprep.subr.mxu0 0.0
        %1560 = vmatpush2.msra.mxu0 0.0
        %1561 = vmatprep.subr.mxu0 0.0
        %1562 = vmatpush2.msra.mxu0 0.0
        %1563 = vmatprep.subr.mxu0 0.0
        %1564 = vmatpush2.msra.mxu0 0.0
        %1565 = vmatprep.subr.mxu0 0.0
        %1566 = vmatpush2.msra.mxu0 0.0
        %1567 = vmatprep.subr.mxu0 0.0
        %1568 = vmatpush2.msra.mxu0 0.0
        %1569 = vmatprep.subr.mxu0 0.0
        %1570 = vmatpush2.msra.mxu0 0.0
        %1571 = vmatprep.subr.mxu0 0.0
        %1572 = vmatpush2.msra.mxu0 0.0
        %1573 = vmatprep.subr.mxu0 0.0
        %1574 = vmatpush2.msra.mxu0 0.0
        %1575 = vmatprep.subr.mxu0 0.0
        %1576 = vmatpush2.msra.mxu0 0.0
        %1577 = vmatprep.mubr.f32.mxu0 0.0
        %1578 = vmatmul.mubr.f32.gmra.mxu0 %v1490
        %v1579 = vpop.f32.mrf.mxu0
        %v1580 = vadd.f32 0.0, %v1579
        %v1581 = vpop.f32.mrf.mxu0
        %1582 = vmatprep.mubr.f32.mxu0 0.0
        %1583 = vmatmul.mubr.f32.gmra.mxu0 %v1493
        %v1584 = vpop.f32.mrf.mxu0
        %v1585 = vadd.f32 0.0, %v1584
        %v1586 = vpop.f32.mrf.mxu0
        %1587 = vmatprep.mubr.f32.mxu0 0.0
        %1588 = vmatmul.mubr.f32.gmra.mxu0 %v1496
        %v1589 = vpop.f32.mrf.mxu0
        %v1590 = vadd.f32 0.0, %v1589
        %v1591 = vpop.f32.mrf.mxu0
        %1592 = vmatprep.mubr.f32.mxu0 0.0
        %1593 = vmatmul.mubr.f32.gmra.mxu0 %v1499
        %v1594 = vpop.f32.mrf.mxu0
        %v1595 = vadd.f32 0.0, %v1594
        %v1596 = vpop.f32.mrf.mxu0
        %1597 = vmatprep.mubr.f32.mxu0 0.0
        %1598 = vmatmul.mubr.f32.gmra.mxu0 %v1502
        %v1599 = vpop.f32.mrf.mxu0
        %v1600 = vadd.f32 0.0, %v1599
        %v1601 = vpop.f32.mrf.mxu0
        %1602 = vmatprep.mubr.f32.mxu0 0.0
        %1603 = vmatmul.mubr.f32.gmra.mxu0 %v1505
        %v1604 = vpop.f32.mrf.mxu0
        %v1605 = vadd.f32 0.0, %v1604
        %v1606 = vpop.f32.mrf.mxu0
        %1607 = vmatprep.mubr.f32.mxu0 0.0
        %1608 = vmatmul.mubr.f32.gmra.mxu0 %v1508
        %v1609 = vpop.f32.mrf.mxu0
        %v1610 = vadd.f32 0.0, %v1609
        %v1611 = vpop.f32.mrf.mxu0
        %1612 = vmatprep.mubr.f32.mxu0 0.0
        %1613 = vmatmul.mubr.f32.gmra.mxu0 %v1511
        %v1614 = vpop.f32.mrf.mxu0
        %v1615 = vadd.f32 0.0, %v1614
        %v1616 = vpop.f32.mrf.mxu0
        %1617 = vdwg.mxu0
        %v1618 = vld [vmem:[%s10] sm:$0xff]
        %v1619 = vld [vmem:[%s10 + $0x8] sm:$0xff]
        %v1620 = vld [vmem:[%s10 + $0x10] sm:$0xff]
        %v1621 = vld [vmem:[%s10 + $0x18] sm:$0xff]
        %s1622 = scalar_lea.vmem %s4, 64
        %v1623 = vld [vmem:[%s1622] sm:$0xff]
        %v1624 = vld [vmem:[%s1622 + $0x8] sm:$0xff]
        %v1625 = vld [vmem:[%s1622 + $0x10] sm:$0xff]
        %v1626 = vld [vmem:[%s1622 + $0x18] sm:$0xff]
        %v1627 = vld [vmem:[%s1622 + $0x20] sm:$0xff]
        %v1628 = vld [vmem:[%s1622 + $0x28] sm:$0xff]
        %v1629 = vld [vmem:[%s1622 + $0x30] sm:$0xff]
        %v1630 = vld [vmem:[%s1622 + $0x38] sm:$0xff]
        %s1631 = scalar_lea.vmem %s7, 1
        %v1632 = vld [vmem:[%s1631] sm:$0x1]
        %v1634 = vlaneseq
        %v1635 = vshrl.u32 %v1634, 7
        %v1636 = vsub.s32 0, %v1635
        %v1637 = vrot.slane %v1632, %v1636
        %1639 = vmatprep.subr.mxu0 0.0
        %1640 = vmatpush1.msra.mxu0 0.0
        %1641 = vmatprep.subr.mxu0 0.0
        %1642 = vmatpush1.msra.mxu0 0.0
        %1643 = vmatprep.subr.mxu0 0.0
        %1644 = vmatpush1.msra.mxu0 0.0
        %1645 = vmatprep.subr.mxu0 0.0
        %1646 = vmatpush1.msra.mxu0 0.0
        %1647 = vmatprep.subr.mxu0 0.0
        %1648 = vmatpush1.msra.mxu0 0.0
        %1649 = vmatprep.subr.mxu0 0.0
        %1650 = vmatpush1.msra.mxu0 0.0
        %1651 = vmatprep.subr.mxu0 0.0
        %1652 = vmatpush1.msra.mxu0 0.0
        %1653 = vmatprep.subr.mxu0 0.0
        %1654 = vmatpush1.msra.mxu0 0.0
        %1655 = vmatprep.subr.mxu0 0.0
        %1656 = vmatpush1.msra.mxu0 %v1630
        %1657 = vmatprep.subr.mxu0 0.0
        %1658 = vmatpush1.msra.mxu0 %v1629
        %1659 = vmatprep.subr.mxu0 0.0
        %1660 = vmatpush1.msra.mxu0 %v1628
        %1661 = vmatprep.subr.mxu0 0.0
        %1662 = vmatpush1.msra.mxu0 %v1627
        %1663 = vmatprep.subr.mxu0 0.0
        %1664 = vmatpush1.msra.mxu0 %v1626
        %1665 = vmatprep.subr.mxu0 0.0
        %1666 = vmatpush1.msra.mxu0 %v1625
        %1667 = vmatprep.subr.mxu0 0.0
        %1668 = vmatpush1.msra.mxu0 %v1624
        %1669 = vmatprep.subr.mxu0 0.0
        %1670 = vmatpush1.msra.mxu0 %v1623
        %1671 = vmatprep.subr.mxu0 0.0
        %1672 = vmatpush2.msra.mxu0 0.0
        %1673 = vmatprep.subr.mxu0 0.0
        %1674 = vmatpush2.msra.mxu0 0.0
        %1675 = vmatprep.subr.mxu0 0.0
        %1676 = vmatpush2.msra.mxu0 0.0
        %1677 = vmatprep.subr.mxu0 0.0
        %1678 = vmatpush2.msra.mxu0 0.0
        %1679 = vmatprep.subr.mxu0 0.0
        %1680 = vmatpush2.msra.mxu0 0.0
        %1681 = vmatprep.subr.mxu0 0.0
        %1682 = vmatpush2.msra.mxu0 0.0
        %1683 = vmatprep.subr.mxu0 0.0
        %1684 = vmatpush2.msra.mxu0 0.0
        %1685 = vmatprep.subr.mxu0 0.0
        %1686 = vmatpush2.msra.mxu0 0.0
        %1687 = vmatprep.subr.mxu0 0.0
        %1688 = vmatpush2.msra.mxu0 0.0
        %1689 = vmatprep.subr.mxu0 0.0
        %1690 = vmatpush2.msra.mxu0 0.0
        %1691 = vmatprep.subr.mxu0 0.0
        %1692 = vmatpush2.msra.mxu0 0.0
        %1693 = vmatprep.subr.mxu0 0.0
        %1694 = vmatpush2.msra.mxu0 0.0
        %1695 = vmatprep.subr.mxu0 0.0
        %1696 = vmatpush2.msra.mxu0 0.0
        %1697 = vmatprep.subr.mxu0 0.0
        %1698 = vmatpush2.msra.mxu0 0.0
        %1699 = vmatprep.subr.mxu0 0.0
        %1700 = vmatpush2.msra.mxu0 0.0
        %1701 = vmatprep.subr.mxu0 0.0
        %1702 = vmatpush2.msra.mxu0 0.0
        %1703 = vmatprep.mubr.f32.mxu0 0.0
        %1704 = vmatmul.mubr.f32.gmra.mxu0 %v872
        %v1705 = vpop.f32.mrf.mxu0
        %v1706 = vadd.f32 %v1637, %v1705
        %v1707 = vpop.f32.mrf.mxu0
        %1708 = vmatprep.mubr.f32.mxu0 0.0
        %1709 = vmatmul.mubr.f32.gmra.mxu0 %v875
        %v1710 = vpop.f32.mrf.mxu0
        %v1711 = vadd.f32 %v1637, %v1710
        %v1712 = vpop.f32.mrf.mxu0
        %1713 = vmatprep.mubr.f32.mxu0 0.0
        %1714 = vmatmul.mubr.f32.gmra.mxu0 %v878
        %v1715 = vpop.f32.mrf.mxu0
        %v1716 = vadd.f32 %v1637, %v1715
        %v1717 = vpop.f32.mrf.mxu0
        %1718 = vmatprep.mubr.f32.mxu0 0.0
        %1719 = vmatmul.mubr.f32.gmra.mxu0 %v881
        %v1720 = vpop.f32.mrf.mxu0
        %v1721 = vadd.f32 %v1637, %v1720
        %v1722 = vpop.f32.mrf.mxu0
        %1723 = vmatprep.mubr.f32.mxu0 0.0
        %1724 = vmatmul.mubr.f32.gmra.mxu0 %v884
        %v1725 = vpop.f32.mrf.mxu0
        %v1726 = vadd.f32 %v1637, %v1725
        %v1727 = vpop.f32.mrf.mxu0
        %1728 = vmatprep.mubr.f32.mxu0 0.0
        %1729 = vmatmul.mubr.f32.gmra.mxu0 %v887
        %v1730 = vpop.f32.mrf.mxu0
        %v1731 = vadd.f32 %v1637, %v1730
        %v1732 = vpop.f32.mrf.mxu0
        %1733 = vmatprep.mubr.f32.mxu0 0.0
        %1734 = vmatmul.mubr.f32.gmra.mxu0 %v890
        %v1735 = vpop.f32.mrf.mxu0
        %v1736 = vadd.f32 %v1637, %v1735
        %v1737 = vpop.f32.mrf.mxu0
        %1738 = vmatprep.mubr.f32.mxu0 0.0
        %1739 = vmatmul.mubr.f32.gmra.mxu0 %v893
        %v1740 = vpop.f32.mrf.mxu0
        %v1741 = vadd.f32 %v1637, %v1740
        %v1742 = vpop.f32.mrf.mxu0
        %1743 = vdwg.mxu0
        %v1744 = vmul.f32 %v1706, 0.17677669
        %v1745 = vmul.f32 %v1711, 0.17677669
        %v1746 = vmul.f32 %v1716, 0.17677669
        %v1747 = vmul.f32 %v1721, 0.17677669
        %v1748 = vmul.f32 %v1726, 0.17677669
        %v1749 = vmul.f32 %v1731, 0.17677669
        %v1750 = vmul.f32 %v1736, 0.17677669
        %v1751 = vmul.f32 %v1741, 0.17677669
        %s1752 = scalar_lea.vmem %s5, 64
        %v1753 = vld [vmem:[%s1752] sm:$0xff]
        %v1754 = vld [vmem:[%s1752 + $0x8] sm:$0xff]
        %v1755 = vld [vmem:[%s1752 + $0x10] sm:$0xff]
        %v1756 = vld [vmem:[%s1752 + $0x18] sm:$0xff]
        %v1757 = vld [vmem:[%s1752 + $0x20] sm:$0xff]
        %v1758 = vld [vmem:[%s1752 + $0x28] sm:$0xff]
        %v1759 = vld [vmem:[%s1752 + $0x30] sm:$0xff]
        %v1760 = vld [vmem:[%s1752 + $0x38] sm:$0xff]
        %s1761 = scalar_lea.vmem %s8, 1
        %v1762 = vld [vmem:[%s1761] sm:$0x1]
        %v1764 = vlaneseq
        %v1765 = vshrl.u32 %v1764, 7
        %v1766 = vsub.s32 0, %v1765
        %v1767 = vrot.slane %v1762, %v1766
        %1769 = vmatprep.subr.mxu0 0.0
        %1770 = vmatpush1.msra.mxu0 0.0
        %1771 = vmatprep.subr.mxu0 0.0
        %1772 = vmatpush1.msra.mxu0 0.0
        %1773 = vmatprep.subr.mxu0 0.0
        %1774 = vmatpush1.msra.mxu0 0.0
        %1775 = vmatprep.subr.mxu0 0.0
        %1776 = vmatpush1.msra.mxu0 0.0
        %1777 = vmatprep.subr.mxu0 0.0
        %1778 = vmatpush1.msra.mxu0 0.0
        %1779 = vmatprep.subr.mxu0 0.0
        %1780 = vmatpush1.msra.mxu0 0.0
        %1781 = vmatprep.subr.mxu0 0.0
        %1782 = vmatpush1.msra.mxu0 0.0
        %1783 = vmatprep.subr.mxu0 0.0
        %1784 = vmatpush1.msra.mxu0 0.0
        %1785 = vmatprep.subr.mxu0 0.0
        %1786 = vmatpush1.msra.mxu0 %v1760
        %1787 = vmatprep.subr.mxu0 0.0
        %1788 = vmatpush1.msra.mxu0 %v1759
        %1789 = vmatprep.subr.mxu0 0.0
        %1790 = vmatpush1.msra.mxu0 %v1758
        %1791 = vmatprep.subr.mxu0 0.0
        %1792 = vmatpush1.msra.mxu0 %v1757
        %1793 = vmatprep.subr.mxu0 0.0
        %1794 = vmatpush1.msra.mxu0 %v1756
        %1795 = vmatprep.subr.mxu0 0.0
        %1796 = vmatpush1.msra.mxu0 %v1755
        %1797 = vmatprep.subr.mxu0 0.0
        %1798 = vmatpush1.msra.mxu0 %v1754
        %1799 = vmatprep.subr.mxu0 0.0
        %1800 = vmatpush1.msra.mxu0 %v1753
        %1801 = vmatprep.subr.mxu0 0.0
        %1802 = vmatpush2.msra.mxu0 0.0
        %1803 = vmatprep.subr.mxu0 0.0
        %1804 = vmatpush2.msra.mxu0 0.0
        %1805 = vmatprep.subr.mxu0 0.0
        %1806 = vmatpush2.msra.mxu0 0.0
        %1807 = vmatprep.subr.mxu0 0.0
        %1808 = vmatpush2.msra.mxu0 0.0
        %1809 = vmatprep.subr.mxu0 0.0
        %1810 = vmatpush2.msra.mxu0 0.0
        %1811 = vmatprep.subr.mxu0 0.0
        %1812 = vmatpush2.msra.mxu0 0.0
        %1813 = vmatprep.subr.mxu0 0.0
        %1814 = vmatpush2.msra.mxu0 0.0
        %1815 = vmatprep.subr.mxu0 0.0
        %1816 = vmatpush2.msra.mxu0 0.0
        %1817 = vmatprep.subr.mxu0 0.0
        %1818 = vmatpush2.msra.mxu0 0.0
        %1819 = vmatprep.subr.mxu0 0.0
        %1820 = vmatpush2.msra.mxu0 0.0
        %1821 = vmatprep.subr.mxu0 0.0
        %1822 = vmatpush2.msra.mxu0 0.0
        %1823 = vmatprep.subr.mxu0 0.0
        %1824 = vmatpush2.msra.mxu0 0.0
        %1825 = vmatprep.subr.mxu0 0.0
        %1826 = vmatpush2.msra.mxu0 0.0
        %1827 = vmatprep.subr.mxu0 0.0
        %1828 = vmatpush2.msra.mxu0 0.0
        %1829 = vmatprep.subr.mxu0 0.0
        %1830 = vmatpush2.msra.mxu0 0.0
        %1831 = vmatprep.subr.mxu0 0.0
        %1832 = vmatpush2.msra.mxu0 0.0
        %1833 = vmatprep.mubr.f32.mxu0 0.0
        %1834 = vmatmul.mubr.f32.gmra.mxu0 %v872
        %v1835 = vpop.f32.mrf.mxu0
        %v1836 = vadd.f32 %v1767, %v1835
        %v1837 = vpop.f32.mrf.mxu0
        %1838 = vmatprep.mubr.f32.mxu0 0.0
        %1839 = vmatmul.mubr.f32.gmra.mxu0 %v875
        %v1840 = vpop.f32.mrf.mxu0
        %v1841 = vadd.f32 %v1767, %v1840
        %v1842 = vpop.f32.mrf.mxu0
        %1843 = vmatprep.mubr.f32.mxu0 0.0
        %1844 = vmatmul.mubr.f32.gmra.mxu0 %v878
        %v1845 = vpop.f32.mrf.mxu0
        %v1846 = vadd.f32 %v1767, %v1845
        %v1847 = vpop.f32.mrf.mxu0
        %1848 = vmatprep.mubr.f32.mxu0 0.0
        %1849 = vmatmul.mubr.f32.gmra.mxu0 %v881
        %v1850 = vpop.f32.mrf.mxu0
        %v1851 = vadd.f32 %v1767, %v1850
        %v1852 = vpop.f32.mrf.mxu0
        %1853 = vmatprep.mubr.f32.mxu0 0.0
        %1854 = vmatmul.mubr.f32.gmra.mxu0 %v884
        %v1855 = vpop.f32.mrf.mxu0
        %v1856 = vadd.f32 %v1767, %v1855
        %v1857 = vpop.f32.mrf.mxu0
        %1858 = vmatprep.mubr.f32.mxu0 0.0
        %1859 = vmatmul.mubr.f32.gmra.mxu0 %v887
        %v1860 = vpop.f32.mrf.mxu0
        %v1861 = vadd.f32 %v1767, %v1860
        %v1862 = vpop.f32.mrf.mxu0
        %1863 = vmatprep.mubr.f32.mxu0 0.0
        %1864 = vmatmul.mubr.f32.gmra.mxu0 %v890
        %v1865 = vpop.f32.mrf.mxu0
        %v1866 = vadd.f32 %v1767, %v1865
        %v1867 = vpop.f32.mrf.mxu0
        %1868 = vmatprep.mubr.f32.mxu0 0.0
        %1869 = vmatmul.mubr.f32.gmra.mxu0 %v893
        %v1870 = vpop.f32.mrf.mxu0
        %v1871 = vadd.f32 %v1767, %v1870
        %v1872 = vpop.f32.mrf.mxu0
        %1873 = vdwg.mxu0
        %s1874 = scalar_lea.vmem %s6, 64
        %v1875 = vld [vmem:[%s1874] sm:$0xff]
        %v1876 = vld [vmem:[%s1874 + $0x8] sm:$0xff]
        %v1877 = vld [vmem:[%s1874 + $0x10] sm:$0xff]
        %v1878 = vld [vmem:[%s1874 + $0x18] sm:$0xff]
        %v1879 = vld [vmem:[%s1874 + $0x20] sm:$0xff]
        %v1880 = vld [vmem:[%s1874 + $0x28] sm:$0xff]
        %v1881 = vld [vmem:[%s1874 + $0x30] sm:$0xff]
        %v1882 = vld [vmem:[%s1874 + $0x38] sm:$0xff]
        %s1883 = scalar_lea.vmem %s9, 1
        %v1884 = vld [vmem:[%s1883] sm:$0x1]
        %v1886 = vlaneseq
        %v1887 = vshrl.u32 %v1886, 7
        %v1888 = vsub.s32 0, %v1887
        %v1889 = vrot.slane %v1884, %v1888
        %1891 = vmatprep.subr.mxu0 0.0
        %1892 = vmatpush1.msra.mxu0 0.0
        %1893 = vmatprep.subr.mxu0 0.0
        %1894 = vmatpush1.msra.mxu0 0.0
        %1895 = vmatprep.subr.mxu0 0.0
        %1896 = vmatpush1.msra.mxu0 0.0
        %1897 = vmatprep.subr.mxu0 0.0
        %1898 = vmatpush1.msra.mxu0 0.0
        %1899 = vmatprep.subr.mxu0 0.0
        %1900 = vmatpush1.msra.mxu0 0.0
        %1901 = vmatprep.subr.mxu0 0.0
        %1902 = vmatpush1.msra.mxu0 0.0
        %1903 = vmatprep.subr.mxu0 0.0
        %1904 = vmatpush1.msra.mxu0 0.0
        %1905 = vmatprep.subr.mxu0 0.0
        %1906 = vmatpush1.msra.mxu0 0.0
        %1907 = vmatprep.subr.mxu0 0.0
        %1908 = vmatpush1.msra.mxu0 %v1882
        %1909 = vmatprep.subr.mxu0 0.0
        %1910 = vmatpush1.msra.mxu0 %v1881
        %1911 = vmatprep.subr.mxu0 0.0
        %1912 = vmatpush1.msra.mxu0 %v1880
        %1913 = vmatprep.subr.mxu0 0.0
        %1914 = vmatpush1.msra.mxu0 %v1879
        %1915 = vmatprep.subr.mxu0 0.0
        %1916 = vmatpush1.msra.mxu0 %v1878
        %1917 = vmatprep.subr.mxu0 0.0
        %1918 = vmatpush1.msra.mxu0 %v1877
        %1919 = vmatprep.subr.mxu0 0.0
        %1920 = vmatpush1.msra.mxu0 %v1876
        %1921 = vmatprep.subr.mxu0 0.0
        %1922 = vmatpush1.msra.mxu0 %v1875
        %1923 = vmatprep.subr.mxu0 0.0
        %1924 = vmatpush2.msra.mxu0 0.0
        %1925 = vmatprep.subr.mxu0 0.0
        %1926 = vmatpush2.msra.mxu0 0.0
        %1927 = vmatprep.subr.mxu0 0.0
        %1928 = vmatpush2.msra.mxu0 0.0
        %1929 = vmatprep.subr.mxu0 0.0
        %1930 = vmatpush2.msra.mxu0 0.0
        %1931 = vmatprep.subr.mxu0 0.0
        %1932 = vmatpush2.msra.mxu0 0.0
        %1933 = vmatprep.subr.mxu0 0.0
        %1934 = vmatpush2.msra.mxu0 0.0
        %1935 = vmatprep.subr.mxu0 0.0
        %1936 = vmatpush2.msra.mxu0 0.0
        %1937 = vmatprep.subr.mxu0 0.0
        %1938 = vmatpush2.msra.mxu0 0.0
        %1939 = vmatprep.subr.mxu0 0.0
        %1940 = vmatpush2.msra.mxu0 0.0
        %1941 = vmatprep.subr.mxu0 0.0
        %1942 = vmatpush2.msra.mxu0 0.0
        %1943 = vmatprep.subr.mxu0 0.0
        %1944 = vmatpush2.msra.mxu0 0.0
        %1945 = vmatprep.subr.mxu0 0.0
        %1946 = vmatpush2.msra.mxu0 0.0
        %1947 = vmatprep.subr.mxu0 0.0
        %1948 = vmatpush2.msra.mxu0 0.0
        %1949 = vmatprep.subr.mxu0 0.0
        %1950 = vmatpush2.msra.mxu0 0.0
        %1951 = vmatprep.subr.mxu0 0.0
        %1952 = vmatpush2.msra.mxu0 0.0
        %1953 = vmatprep.subr.mxu0 0.0
        %1954 = vmatpush2.msra.mxu0 0.0
        %1955 = vmatprep.mubr.f32.mxu0 0.0
        %1956 = vmatmul.mubr.f32.gmra.mxu0 %v872
        %v1957 = vpop.f32.mrf.mxu0
        %v1958 = vadd.f32 %v1889, %v1957
        %v1959 = vpop.f32.mrf.mxu0
        %1960 = vmatprep.mubr.f32.mxu0 0.0
        %1961 = vmatmul.mubr.f32.gmra.mxu0 %v875
        %v1962 = vpop.f32.mrf.mxu0
        %v1963 = vadd.f32 %v1889, %v1962
        %v1964 = vpop.f32.mrf.mxu0
        %1965 = vmatprep.mubr.f32.mxu0 0.0
        %1966 = vmatmul.mubr.f32.gmra.mxu0 %v878
        %v1967 = vpop.f32.mrf.mxu0
        %v1968 = vadd.f32 %v1889, %v1967
        %v1969 = vpop.f32.mrf.mxu0
        %1970 = vmatprep.mubr.f32.mxu0 0.0
        %1971 = vmatmul.mubr.f32.gmra.mxu0 %v881
        %v1972 = vpop.f32.mrf.mxu0
        %v1973 = vadd.f32 %v1889, %v1972
        %v1974 = vpop.f32.mrf.mxu0
        %1975 = vmatprep.mubr.f32.mxu0 0.0
        %1976 = vmatmul.mubr.f32.gmra.mxu0 %v884
        %v1977 = vpop.f32.mrf.mxu0
        %v1978 = vadd.f32 %v1889, %v1977
        %v1979 = vpop.f32.mrf.mxu0
        %1980 = vmatprep.mubr.f32.mxu0 0.0
        %1981 = vmatmul.mubr.f32.gmra.mxu0 %v887
        %v1982 = vpop.f32.mrf.mxu0
        %v1983 = vadd.f32 %v1889, %v1982
        %v1984 = vpop.f32.mrf.mxu0
        %1985 = vmatprep.mubr.f32.mxu0 0.0
        %1986 = vmatmul.mubr.f32.gmra.mxu0 %v890
        %v1987 = vpop.f32.mrf.mxu0
        %v1988 = vadd.f32 %v1889, %v1987
        %v1989 = vpop.f32.mrf.mxu0
        %1990 = vmatprep.mubr.f32.mxu0 0.0
        %1991 = vmatmul.mubr.f32.gmra.mxu0 %v893
        %v1992 = vpop.f32.mrf.mxu0
        %v1993 = vadd.f32 %v1889, %v1992
        %v1994 = vpop.f32.mrf.mxu0
        %1995 = vdwg.mxu0
        %v1997 = vsel %vm631, %v1744, 0
        %v2000 = vsel %vm631, %v1745, 0
        %v2003 = vsel %vm631, %v1746, 0
        %v2006 = vsel %vm631, %v1747, 0
        %v2009 = vsel %vm631, %v1748, 0
        %v2012 = vsel %vm631, %v1749, 0
        %v2015 = vsel %vm631, %v1750, 0
        %v2018 = vsel %vm631, %v1751, 0
        %v2021 = vsel %vm631, %v1836, 0
        %v2024 = vsel %vm631, %v1841, 0
        %v2027 = vsel %vm631, %v1846, 0
        %v2030 = vsel %vm631, %v1851, 0
        %v2033 = vsel %vm631, %v1856, 0
        %v2036 = vsel %vm631, %v1861, 0
        %v2039 = vsel %vm631, %v1866, 0
        %v2042 = vsel %vm631, %v1871, 0
        %2044 = vmatprep.subr.mxu0 0.0
        %2045 = vmatpush1.xpose.msra.mxu0 0.0
        %2046 = vmatprep.subr.mxu0 0.0
        %2047 = vmatpush1.xpose.msra.mxu0 0.0
        %2048 = vmatprep.subr.mxu0 0.0
        %2049 = vmatpush1.xpose.msra.mxu0 0.0
        %2050 = vmatprep.subr.mxu0 0.0
        %2051 = vmatpush1.xpose.msra.mxu0 0.0
        %2052 = vmatprep.subr.mxu0 0.0
        %2053 = vmatpush1.xpose.msra.mxu0 0.0
        %2054 = vmatprep.subr.mxu0 0.0
        %2055 = vmatpush1.xpose.msra.mxu0 0.0
        %2056 = vmatprep.subr.mxu0 0.0
        %2057 = vmatpush1.xpose.msra.mxu0 0.0
        %2058 = vmatprep.subr.mxu0 0.0
        %2059 = vmatpush1.xpose.msra.mxu0 0.0
        %2060 = vmatprep.subr.mxu0 0.0
        %2061 = vmatpush1.xpose.msra.mxu0 %v2042
        %2062 = vmatprep.subr.mxu0 0.0
        %2063 = vmatpush1.xpose.msra.mxu0 %v2039
        %2064 = vmatprep.subr.mxu0 0.0
        %2065 = vmatpush1.xpose.msra.mxu0 %v2036
        %2066 = vmatprep.subr.mxu0 0.0
        %2067 = vmatpush1.xpose.msra.mxu0 %v2033
        %2068 = vmatprep.subr.mxu0 0.0
        %2069 = vmatpush1.xpose.msra.mxu0 %v2030
        %2070 = vmatprep.subr.mxu0 0.0
        %2071 = vmatpush1.xpose.msra.mxu0 %v2027
        %2072 = vmatprep.subr.mxu0 0.0
        %2073 = vmatpush1.xpose.msra.mxu0 %v2024
        %2074 = vmatprep.subr.mxu0 0.0
        %2075 = vmatpush1.xpose.msra.mxu0 %v2021
        %2076 = vmatprep.subr.mxu0 0.0
        %2077 = vmatpush2.xpose.msra.mxu0 0.0
        %2078 = vmatprep.subr.mxu0 0.0
        %2079 = vmatpush2.xpose.msra.mxu0 0.0
        %2080 = vmatprep.subr.mxu0 0.0
        %2081 = vmatpush2.xpose.msra.mxu0 0.0
        %2082 = vmatprep.subr.mxu0 0.0
        %2083 = vmatpush2.xpose.msra.mxu0 0.0
        %2084 = vmatprep.subr.mxu0 0.0
        %2085 = vmatpush2.xpose.msra.mxu0 0.0
        %2086 = vmatprep.subr.mxu0 0.0
        %2087 = vmatpush2.xpose.msra.mxu0 0.0
        %2088 = vmatprep.subr.mxu0 0.0
        %2089 = vmatpush2.xpose.msra.mxu0 0.0
        %2090 = vmatprep.subr.mxu0 0.0
        %2091 = vmatpush2.xpose.msra.mxu0 0.0
        %2092 = vmatprep.subr.mxu0 0.0
        %2093 = vmatpush2.xpose.msra.mxu0 0.0
        %2094 = vmatprep.subr.mxu0 0.0
        %2095 = vmatpush2.xpose.msra.mxu0 0.0
        %2096 = vmatprep.subr.mxu0 0.0
        %2097 = vmatpush2.xpose.msra.mxu0 0.0
        %2098 = vmatprep.subr.mxu0 0.0
        %2099 = vmatpush2.xpose.msra.mxu0 0.0
        %2100 = vmatprep.subr.mxu0 0.0
        %2101 = vmatpush2.xpose.msra.mxu0 0.0
        %2102 = vmatprep.subr.mxu0 0.0
        %2103 = vmatpush2.xpose.msra.mxu0 0.0
        %2104 = vmatprep.subr.mxu0 0.0
        %2105 = vmatpush2.xpose.msra.mxu0 0.0
        %2106 = vmatprep.subr.mxu0 0.0
        %2107 = vmatpush2.xpose.msra.mxu0 0.0
        %2108 = vmatprep.mubr.f32.mxu0 0.0
        %2109 = vmatmul.mubr.f32.gmra.mxu0 %v1997
        %v2110 = vpop.f32.mrf.mxu0
        %v2111 = vadd.f32 0.0, %v2110
        %v2112 = vpop.f32.mrf.mxu0
        %2113 = vmatprep.mubr.f32.mxu0 0.0
        %2114 = vmatmul.mubr.f32.gmra.mxu0 %v2000
        %v2115 = vpop.f32.mrf.mxu0
        %v2116 = vadd.f32 0.0, %v2115
        %v2117 = vpop.f32.mrf.mxu0
        %2118 = vmatprep.mubr.f32.mxu0 0.0
        %2119 = vmatmul.mubr.f32.gmra.mxu0 %v2003
        %v2120 = vpop.f32.mrf.mxu0
        %v2121 = vadd.f32 0.0, %v2120
        %v2122 = vpop.f32.mrf.mxu0
        %2123 = vmatprep.mubr.f32.mxu0 0.0
        %2124 = vmatmul.mubr.f32.gmra.mxu0 %v2006
        %v2125 = vpop.f32.mrf.mxu0
        %v2126 = vadd.f32 0.0, %v2125
        %v2127 = vpop.f32.mrf.mxu0
        %2128 = vmatprep.mubr.f32.mxu0 0.0
        %2129 = vmatmul.mubr.f32.gmra.mxu0 %v2009
        %v2130 = vpop.f32.mrf.mxu0
        %v2131 = vadd.f32 0.0, %v2130
        %v2132 = vpop.f32.mrf.mxu0
        %2133 = vmatprep.mubr.f32.mxu0 0.0
        %2134 = vmatmul.mubr.f32.gmra.mxu0 %v2012
        %v2135 = vpop.f32.mrf.mxu0
        %v2136 = vadd.f32 0.0, %v2135
        %v2137 = vpop.f32.mrf.mxu0
        %2138 = vmatprep.mubr.f32.mxu0 0.0
        %2139 = vmatmul.mubr.f32.gmra.mxu0 %v2015
        %v2140 = vpop.f32.mrf.mxu0
        %v2141 = vadd.f32 0.0, %v2140
        %v2142 = vpop.f32.mrf.mxu0
        %2143 = vmatprep.mubr.f32.mxu0 0.0
        %2144 = vmatmul.mubr.f32.gmra.mxu0 %v2018
        %v2145 = vpop.f32.mrf.mxu0
        %v2146 = vadd.f32 0.0, %v2145
        %v2147 = vpop.f32.mrf.mxu0
        %2148 = vdwg.mxu0
        %v2149 = vsel %vm428, %v2111, -inf
        %2150 = vmax.xlane.f32.xlu0 %v2149
        %v2151 = vpop.xlane.xlu0 %2150
        %v2152 = vsel %vm428, %v2116, -inf
        %2153 = vmax.xlane.f32.xlu0 %v2152
        %v2154 = vpop.xlane.xlu0 %2153
        %v2155 = vsel %vm428, %v2121, -inf
        %2156 = vmax.xlane.f32.xlu0 %v2155
        %v2157 = vpop.xlane.xlu0 %2156
        %v2158 = vsel %vm428, %v2126, -inf
        %2159 = vmax.xlane.f32.xlu0 %v2158
        %v2160 = vpop.xlane.xlu0 %2159
        %v2161 = vsel %vm428, %v2131, -inf
        %2162 = vmax.xlane.f32.xlu0 %v2161
        %v2163 = vpop.xlane.xlu0 %2162
        %v2164 = vsel %vm428, %v2136, -inf
        %2165 = vmax.xlane.f32.xlu0 %v2164
        %v2166 = vpop.xlane.xlu0 %2165
        %v2167 = vsel %vm428, %v2141, -inf
        %2168 = vmax.xlane.f32.xlu0 %v2167
        %v2169 = vpop.xlane.xlu0 %2168
        %v2170 = vsel %vm428, %v2146, -inf
        %2171 = vmax.xlane.f32.xlu0 %v2170
        %v2172 = vpop.xlane.xlu0 %2171
        %v2173 = vsub.f32 %v2111, %v2151
        %v2174 = vsub.f32 %v2116, %v2154
        %v2175 = vsub.f32 %v2121, %v2157
        %v2176 = vsub.f32 %v2126, %v2160
        %v2177 = vsub.f32 %v2131, %v2163
        %v2178 = vsub.f32 %v2136, %v2166
        %v2179 = vsub.f32 %v2141, %v2169
        %v2180 = vsub.f32 %v2146, %v2172
        %v2181 = vmul.f32 %v2173, 1.442695
        %v2182 = vpow.pop %v2181
        %v2183 = vmul.f32 %v2174, 1.442695
        %v2184 = vpow.pop %v2183
        %v2185 = vmul.f32 %v2175, 1.442695
        %v2186 = vpow.pop %v2185
        %v2187 = vmul.f32 %v2176, 1.442695
        %v2188 = vpow.pop %v2187
        %v2189 = vmul.f32 %v2177, 1.442695
        %v2190 = vpow.pop %v2189
        %v2191 = vmul.f32 %v2178, 1.442695
        %v2192 = vpow.pop %v2191
        %v2193 = vmul.f32 %v2179, 1.442695
        %v2194 = vpow.pop %v2193
        %v2195 = vmul.f32 %v2180, 1.442695
        %v2196 = vpow.pop %v2195
        %v2197 = vsel %vm428, %v2182, 0.0
        %2198 = vadd.xlane.f32.xlu0 %v2197
        %v2199 = vpop.xlane.xlu0 %2198
        %v2200 = vsel %vm428, %v2184, 0.0
        %2201 = vadd.xlane.f32.xlu0 %v2200
        %v2202 = vpop.xlane.xlu0 %2201
        %v2203 = vsel %vm428, %v2186, 0.0
        %2204 = vadd.xlane.f32.xlu0 %v2203
        %v2205 = vpop.xlane.xlu0 %2204
        %v2206 = vsel %vm428, %v2188, 0.0
        %2207 = vadd.xlane.f32.xlu0 %v2206
        %v2208 = vpop.xlane.xlu0 %2207
        %v2209 = vsel %vm428, %v2190, 0.0
        %2210 = vadd.xlane.f32.xlu0 %v2209
        %v2211 = vpop.xlane.xlu0 %2210
        %v2212 = vsel %vm428, %v2192, 0.0
        %2213 = vadd.xlane.f32.xlu0 %v2212
        %v2214 = vpop.xlane.xlu0 %2213
        %v2215 = vsel %vm428, %v2194, 0.0
        %2216 = vadd.xlane.f32.xlu0 %v2215
        %v2217 = vpop.xlane.xlu0 %2216
        %v2218 = vsel %vm428, %v2196, 0.0
        %2219 = vadd.xlane.f32.xlu0 %v2218
        %v2220 = vpop.xlane.xlu0 %2219
        %v2221 = vrcp.pop %v2199
        %v2222 = vrcp.pop %v2202
        %v2223 = vrcp.pop %v2205
        %v2224 = vrcp.pop %v2208
        %v2225 = vrcp.pop %v2211
        %v2226 = vrcp.pop %v2214
        %v2227 = vrcp.pop %v2217
        %v2228 = vrcp.pop %v2220
        %v2229 = vmul.f32 %v2182, %v2221
        %v2230 = vmul.f32 %v2184, %v2222
        %v2231 = vmul.f32 %v2186, %v2223
        %v2232 = vmul.f32 %v2188, %v2224
        %v2233 = vmul.f32 %v2190, %v2225
        %v2234 = vmul.f32 %v2192, %v2226
        %v2235 = vmul.f32 %v2194, %v2227
        %v2236 = vmul.f32 %v2196, %v2228
        %v2238 = vsel %vm428, %v2229, 0
        %v2241 = vsel %vm428, %v2230, 0
        %v2244 = vsel %vm428, %v2231, 0
        %v2247 = vsel %vm428, %v2232, 0
        %v2250 = vsel %vm428, %v2233, 0
        %v2253 = vsel %vm428, %v2234, 0
        %v2256 = vsel %vm428, %v2235, 0
        %v2259 = vsel %vm428, %v2236, 0
        %2261 = vmatprep.subr.mxu0 0.0
        %2262 = vmatpush1.msra.mxu0 0.0
        %2263 = vmatprep.subr.mxu0 0.0
        %2264 = vmatpush1.msra.mxu0 0.0
        %2265 = vmatprep.subr.mxu0 0.0
        %2266 = vmatpush1.msra.mxu0 0.0
        %2267 = vmatprep.subr.mxu0 0.0
        %2268 = vmatpush1.msra.mxu0 0.0
        %2269 = vmatprep.subr.mxu0 0.0
        %2270 = vmatpush1.msra.mxu0 0.0
        %2271 = vmatprep.subr.mxu0 0.0
        %2272 = vmatpush1.msra.mxu0 0.0
        %2273 = vmatprep.subr.mxu0 0.0
        %2274 = vmatpush1.msra.mxu0 0.0
        %2275 = vmatprep.subr.mxu0 0.0
        %2276 = vmatpush1.msra.mxu0 0.0
        %2277 = vmatprep.subr.mxu0 0.0
        %2278 = vmatpush1.msra.mxu0 %v1993
        %2279 = vmatprep.subr.mxu0 0.0
        %2280 = vmatpush1.msra.mxu0 %v1988
        %2281 = vmatprep.subr.mxu0 0.0
        %2282 = vmatpush1.msra.mxu0 %v1983
        %2283 = vmatprep.subr.mxu0 0.0
        %2284 = vmatpush1.msra.mxu0 %v1978
        %2285 = vmatprep.subr.mxu0 0.0
        %2286 = vmatpush1.msra.mxu0 %v1973
        %2287 = vmatprep.subr.mxu0 0.0
        %2288 = vmatpush1.msra.mxu0 %v1968
        %2289 = vmatprep.subr.mxu0 0.0
        %2290 = vmatpush1.msra.mxu0 %v1963
        %2291 = vmatprep.subr.mxu0 0.0
        %2292 = vmatpush1.msra.mxu0 %v1958
        %2293 = vmatprep.subr.mxu0 0.0
        %2294 = vmatpush2.msra.mxu0 0.0
        %2295 = vmatprep.subr.mxu0 0.0
        %2296 = vmatpush2.msra.mxu0 0.0
        %2297 = vmatprep.subr.mxu0 0.0
        %2298 = vmatpush2.msra.mxu0 0.0
        %2299 = vmatprep.subr.mxu0 0.0
        %2300 = vmatpush2.msra.mxu0 0.0
        %2301 = vmatprep.subr.mxu0 0.0
        %2302 = vmatpush2.msra.mxu0 0.0
        %2303 = vmatprep.subr.mxu0 0.0
        %2304 = vmatpush2.msra.mxu0 0.0
        %2305 = vmatprep.subr.mxu0 0.0
        %2306 = vmatpush2.msra.mxu0 0.0
        %2307 = vmatprep.subr.mxu0 0.0
        %2308 = vmatpush2.msra.mxu0 0.0
        %2309 = vmatprep.subr.mxu0 0.0
        %2310 = vmatpush2.msra.mxu0 0.0
        %2311 = vmatprep.subr.mxu0 0.0
        %2312 = vmatpush2.msra.mxu0 0.0
        %2313 = vmatprep.subr.mxu0 0.0
        %2314 = vmatpush2.msra.mxu0 0.0
        %2315 = vmatprep.subr.mxu0 0.0
        %2316 = vmatpush2.msra.mxu0 0.0
        %2317 = vmatprep.subr.mxu0 0.0
        %2318 = vmatpush2.msra.mxu0 0.0
        %2319 = vmatprep.subr.mxu0 0.0
        %2320 = vmatpush2.msra.mxu0 0.0
        %2321 = vmatprep.subr.mxu0 0.0
        %2322 = vmatpush2.msra.mxu0 0.0
        %2323 = vmatprep.subr.mxu0 0.0
        %2324 = vmatpush2.msra.mxu0 0.0
        %2325 = vmatprep.mubr.f32.mxu0 0.0
        %2326 = vmatmul.mubr.f32.gmra.mxu0 %v2238
        %v2327 = vpop.f32.mrf.mxu0
        %v2328 = vadd.f32 0.0, %v2327
        %v2329 = vpop.f32.mrf.mxu0
        %2330 = vmatprep.mubr.f32.mxu0 0.0
        %2331 = vmatmul.mubr.f32.gmra.mxu0 %v2241
        %v2332 = vpop.f32.mrf.mxu0
        %v2333 = vadd.f32 0.0, %v2332
        %v2334 = vpop.f32.mrf.mxu0
        %2335 = vmatprep.mubr.f32.mxu0 0.0
        %2336 = vmatmul.mubr.f32.gmra.mxu0 %v2244
        %v2337 = vpop.f32.mrf.mxu0
        %v2338 = vadd.f32 0.0, %v2337
        %v2339 = vpop.f32.mrf.mxu0
        %2340 = vmatprep.mubr.f32.mxu0 0.0
        %2341 = vmatmul.mubr.f32.gmra.mxu0 %v2247
        %v2342 = vpop.f32.mrf.mxu0
        %v2343 = vadd.f32 0.0, %v2342
        %v2344 = vpop.f32.mrf.mxu0
        %2345 = vmatprep.mubr.f32.mxu0 0.0
        %2346 = vmatmul.mubr.f32.gmra.mxu0 %v2250
        %v2347 = vpop.f32.mrf.mxu0
        %v2348 = vadd.f32 0.0, %v2347
        %v2349 = vpop.f32.mrf.mxu0
        %2350 = vmatprep.mubr.f32.mxu0 0.0
        %2351 = vmatmul.mubr.f32.gmra.mxu0 %v2253
        %v2352 = vpop.f32.mrf.mxu0
        %v2353 = vadd.f32 0.0, %v2352
        %v2354 = vpop.f32.mrf.mxu0
        %2355 = vmatprep.mubr.f32.mxu0 0.0
        %2356 = vmatmul.mubr.f32.gmra.mxu0 %v2256
        %v2357 = vpop.f32.mrf.mxu0
        %v2358 = vadd.f32 0.0, %v2357
        %v2359 = vpop.f32.mrf.mxu0
        %2360 = vmatprep.mubr.f32.mxu0 0.0
        %2361 = vmatmul.mubr.f32.gmra.mxu0 %v2259
        %v2362 = vpop.f32.mrf.mxu0
        %v2363 = vadd.f32 0.0, %v2362
        %v2364 = vpop.f32.mrf.mxu0
        %2365 = vdwg.mxu0
        %s2366 = scalar_lea.vmem %s10, 32
        %v2367 = vld [vmem:[%s2366] sm:$0xff]
        %v2368 = vld [vmem:[%s2366 + $0x8] sm:$0xff]
        %v2369 = vld [vmem:[%s2366 + $0x10] sm:$0xff]
        %v2370 = vld [vmem:[%s2366 + $0x18] sm:$0xff]
        %v2372 = vsel %vm631, %v2328, 0
        %v2375 = vsel %vm631, %v2333, 0
        %v2378 = vsel %vm631, %v2338, 0
        %v2381 = vsel %vm631, %v2343, 0
        %v2384 = vsel %vm631, %v2348, 0
        %v2387 = vsel %vm631, %v2353, 0
        %v2390 = vsel %vm631, %v2358, 0
        %v2393 = vsel %vm631, %v2363, 0
        %2395 = vmatprep.subr.mxu0 0.0
        %2396 = vmatpush1.msra.mxu0 0.0
        %2397 = vmatprep.subr.mxu0 0.0
        %2398 = vmatpush1.msra.mxu0 0.0
        %2399 = vmatprep.subr.mxu0 0.0
        %2400 = vmatpush1.msra.mxu0 0.0
        %2401 = vmatprep.subr.mxu0 0.0
        %2402 = vmatpush1.msra.mxu0 0.0
        %2403 = vmatprep.subr.mxu0 0.0
        %2404 = vmatpush1.msra.mxu0 0.0
        %2405 = vmatprep.subr.mxu0 0.0
        %2406 = vmatpush1.msra.mxu0 0.0
        %2407 = vmatprep.subr.mxu0 0.0
        %2408 = vmatpush1.msra.mxu0 0.0
        %2409 = vmatprep.subr.mxu0 0.0
        %2410 = vmatpush1.msra.mxu0 0.0
        %2411 = vmatprep.subr.mxu0 0.0
        %2412 = vmatpush1.msra.mxu0 0.0
        %2413 = vmatprep.subr.mxu0 0.0
        %2414 = vmatpush1.msra.mxu0 0.0
        %2415 = vmatprep.subr.mxu0 0.0
        %2416 = vmatpush1.msra.mxu0 0.0
        %2417 = vmatprep.subr.mxu0 0.0
        %2418 = vmatpush1.msra.mxu0 0.0
        %2419 = vmatprep.subr.mxu0 0.0
        %2420 = vmatpush1.msra.mxu0 %v2370
        %2421 = vmatprep.subr.mxu0 0.0
        %2422 = vmatpush1.msra.mxu0 %v2369
        %2423 = vmatprep.subr.mxu0 0.0
        %2424 = vmatpush1.msra.mxu0 %v2368
        %2425 = vmatprep.subr.mxu0 0.0
        %2426 = vmatpush1.msra.mxu0 %v2367
        %2427 = vmatprep.subr.mxu0 0.0
        %2428 = vmatpush2.msra.mxu0 0.0
        %2429 = vmatprep.subr.mxu0 0.0
        %2430 = vmatpush2.msra.mxu0 0.0
        %2431 = vmatprep.subr.mxu0 0.0
        %2432 = vmatpush2.msra.mxu0 0.0
        %2433 = vmatprep.subr.mxu0 0.0
        %2434 = vmatpush2.msra.mxu0 0.0
        %2435 = vmatprep.subr.mxu0 0.0
        %2436 = vmatpush2.msra.mxu0 0.0
        %2437 = vmatprep.subr.mxu0 0.0
        %2438 = vmatpush2.msra.mxu0 0.0
        %2439 = vmatprep.subr.mxu0 0.0
        %2440 = vmatpush2.msra.mxu0 0.0
        %2441 = vmatprep.subr.mxu0 0.0
        %2442 = vmatpush2.msra.mxu0 0.0
        %2443 = vmatprep.subr.mxu0 0.0
        %2444 = vmatpush2.msra.mxu0 0.0
        %2445 = vmatprep.subr.mxu0 0.0
        %2446 = vmatpush2.msra.mxu0 0.0
        %2447 = vmatprep.subr.mxu0 0.0
        %2448 = vmatpush2.msra.mxu0 0.0
        %2449 = vmatprep.subr.mxu0 0.0
        %2450 = vmatpush2.msra.mxu0 0.0
        %2451 = vmatprep.subr.mxu0 0.0
        %2452 = vmatpush2.msra.mxu0 0.0
        %2453 = vmatprep.subr.mxu0 0.0
        %2454 = vmatpush2.msra.mxu0 0.0
        %2455 = vmatprep.subr.mxu0 0.0
        %2456 = vmatpush2.msra.mxu0 0.0
        %2457 = vmatprep.subr.mxu0 0.0
        %2458 = vmatpush2.msra.mxu0 0.0
        %2459 = vmatprep.mubr.f32.mxu0 0.0
        %2460 = vmatmul.mubr.f32.gmra.mxu0 %v2372
        %v2461 = vpop.f32.mrf.mxu0
        %v2462 = vadd.f32 0.0, %v2461
        %v2463 = vpop.f32.mrf.mxu0
        %2464 = vmatprep.mubr.f32.mxu0 0.0
        %2465 = vmatmul.mubr.f32.gmra.mxu0 %v2375
        %v2466 = vpop.f32.mrf.mxu0
        %v2467 = vadd.f32 0.0, %v2466
        %v2468 = vpop.f32.mrf.mxu0
        %2469 = vmatprep.mubr.f32.mxu0 0.0
        %2470 = vmatmul.mubr.f32.gmra.mxu0 %v2378
        %v2471 = vpop.f32.mrf.mxu0
        %v2472 = vadd.f32 0.0, %v2471
        %v2473 = vpop.f32.mrf.mxu0
        %2474 = vmatprep.mubr.f32.mxu0 0.0
        %2475 = vmatmul.mubr.f32.gmra.mxu0 %v2381
        %v2476 = vpop.f32.mrf.mxu0
        %v2477 = vadd.f32 0.0, %v2476
        %v2478 = vpop.f32.mrf.mxu0
        %2479 = vmatprep.mubr.f32.mxu0 0.0
        %2480 = vmatmul.mubr.f32.gmra.mxu0 %v2384
        %v2481 = vpop.f32.mrf.mxu0
        %v2482 = vadd.f32 0.0, %v2481
        %v2483 = vpop.f32.mrf.mxu0
        %2484 = vmatprep.mubr.f32.mxu0 0.0
        %2485 = vmatmul.mubr.f32.gmra.mxu0 %v2387
        %v2486 = vpop.f32.mrf.mxu0
        %v2487 = vadd.f32 0.0, %v2486
        %v2488 = vpop.f32.mrf.mxu0
        %2489 = vmatprep.mubr.f32.mxu0 0.0
        %2490 = vmatmul.mubr.f32.gmra.mxu0 %v2390
        %v2491 = vpop.f32.mrf.mxu0
        %v2492 = vadd.f32 0.0, %v2491
        %v2493 = vpop.f32.mrf.mxu0
        %2494 = vmatprep.mubr.f32.mxu0 0.0
        %2495 = vmatmul.mubr.f32.gmra.mxu0 %v2393
        %v2496 = vpop.f32.mrf.mxu0
        %v2497 = vadd.f32 0.0, %v2496
        %v2498 = vpop.f32.mrf.mxu0
        %2499 = vdwg.mxu0
        %v2501 = vsel %vm631, %v1580, 0
        %v2504 = vsel %vm631, %v1585, 0
        %v2507 = vsel %vm631, %v1590, 0
        %v2510 = vsel %vm631, %v1595, 0
        %v2513 = vsel %vm631, %v1600, 0
        %v2516 = vsel %vm631, %v1605, 0
        %v2519 = vsel %vm631, %v1610, 0
        %v2522 = vsel %vm631, %v1615, 0
        %2524 = vmatprep.subr.mxu0 0.0
        %2525 = vmatpush1.msra.mxu0 0.0
        %2526 = vmatprep.subr.mxu0 0.0
        %2527 = vmatpush1.msra.mxu0 0.0
        %2528 = vmatprep.subr.mxu0 0.0
        %2529 = vmatpush1.msra.mxu0 0.0
        %2530 = vmatprep.subr.mxu0 0.0
        %2531 = vmatpush1.msra.mxu0 0.0
        %2532 = vmatprep.subr.mxu0 0.0
        %2533 = vmatpush1.msra.mxu0 0.0
        %2534 = vmatprep.subr.mxu0 0.0
        %2535 = vmatpush1.msra.mxu0 0.0
        %2536 = vmatprep.subr.mxu0 0.0
        %2537 = vmatpush1.msra.mxu0 0.0
        %2538 = vmatprep.subr.mxu0 0.0
        %2539 = vmatpush1.msra.mxu0 0.0
        %2540 = vmatprep.subr.mxu0 0.0
        %2541 = vmatpush1.msra.mxu0 0.0
        %2542 = vmatprep.subr.mxu0 0.0
        %2543 = vmatpush1.msra.mxu0 0.0
        %2544 = vmatprep.subr.mxu0 0.0
        %2545 = vmatpush1.msra.mxu0 0.0
        %2546 = vmatprep.subr.mxu0 0.0
        %2547 = vmatpush1.msra.mxu0 0.0
        %2548 = vmatprep.subr.mxu0 0.0
        %2549 = vmatpush1.msra.mxu0 %v1621
        %2550 = vmatprep.subr.mxu0 0.0
        %2551 = vmatpush1.msra.mxu0 %v1620
        %2552 = vmatprep.subr.mxu0 0.0
        %2553 = vmatpush1.msra.mxu0 %v1619
        %2554 = vmatprep.subr.mxu0 0.0
        %2555 = vmatpush1.msra.mxu0 %v1618
        %2556 = vmatprep.subr.mxu0 0.0
        %2557 = vmatpush2.msra.mxu0 0.0
        %2558 = vmatprep.subr.mxu0 0.0
        %2559 = vmatpush2.msra.mxu0 0.0
        %2560 = vmatprep.subr.mxu0 0.0
        %2561 = vmatpush2.msra.mxu0 0.0
        %2562 = vmatprep.subr.mxu0 0.0
        %2563 = vmatpush2.msra.mxu0 0.0
        %2564 = vmatprep.subr.mxu0 0.0
        %2565 = vmatpush2.msra.mxu0 0.0
        %2566 = vmatprep.subr.mxu0 0.0
        %2567 = vmatpush2.msra.mxu0 0.0
        %2568 = vmatprep.subr.mxu0 0.0
        %2569 = vmatpush2.msra.mxu0 0.0
        %2570 = vmatprep.subr.mxu0 0.0
        %2571 = vmatpush2.msra.mxu0 0.0
        %2572 = vmatprep.subr.mxu0 0.0
        %2573 = vmatpush2.msra.mxu0 0.0
        %2574 = vmatprep.subr.mxu0 0.0
        %2575 = vmatpush2.msra.mxu0 0.0
        %2576 = vmatprep.subr.mxu0 0.0
        %2577 = vmatpush2.msra.mxu0 0.0
        %2578 = vmatprep.subr.mxu0 0.0
        %2579 = vmatpush2.msra.mxu0 0.0
        %2580 = vmatprep.subr.mxu0 0.0
        %2581 = vmatpush2.msra.mxu0 0.0
        %2582 = vmatprep.subr.mxu0 0.0
        %2583 = vmatpush2.msra.mxu0 0.0
        %2584 = vmatprep.subr.mxu0 0.0
        %2585 = vmatpush2.msra.mxu0 0.0
        %2586 = vmatprep.subr.mxu0 0.0
        %2587 = vmatpush2.msra.mxu0 0.0
        %2588 = vmatprep.mubr.f32.mxu0 0.0
        %2589 = vmatmul.mubr.f32.gmra.mxu0 %v2501
        %v2590 = vpop.f32.mrf.mxu0
        %v2591 = vadd.f32 %v2462, %v2590
        %v2592 = vpop.f32.mrf.mxu0
        %2593 = vmatprep.mubr.f32.mxu0 0.0
        %2594 = vmatmul.mubr.f32.gmra.mxu0 %v2504
        %v2595 = vpop.f32.mrf.mxu0
        %v2596 = vadd.f32 %v2467, %v2595
        %v2597 = vpop.f32.mrf.mxu0
        %2598 = vmatprep.mubr.f32.mxu0 0.0
        %2599 = vmatmul.mubr.f32.gmra.mxu0 %v2507
        %v2600 = vpop.f32.mrf.mxu0
        %v2601 = vadd.f32 %v2472, %v2600
        %v2602 = vpop.f32.mrf.mxu0
        %2603 = vmatprep.mubr.f32.mxu0 0.0
        %2604 = vmatmul.mubr.f32.gmra.mxu0 %v2510
        %v2605 = vpop.f32.mrf.mxu0
        %v2606 = vadd.f32 %v2477, %v2605
        %v2607 = vpop.f32.mrf.mxu0
        %2608 = vmatprep.mubr.f32.mxu0 0.0
        %2609 = vmatmul.mubr.f32.gmra.mxu0 %v2513
        %v2610 = vpop.f32.mrf.mxu0
        %v2611 = vadd.f32 %v2482, %v2610
        %v2612 = vpop.f32.mrf.mxu0
        %2613 = vmatprep.mubr.f32.mxu0 0.0
        %2614 = vmatmul.mubr.f32.gmra.mxu0 %v2516
        %v2615 = vpop.f32.mrf.mxu0
        %v2616 = vadd.f32 %v2487, %v2615
        %v2617 = vpop.f32.mrf.mxu0
        %2618 = vmatprep.mubr.f32.mxu0 0.0
        %2619 = vmatmul.mubr.f32.gmra.mxu0 %v2519
        %v2620 = vpop.f32.mrf.mxu0
        %v2621 = vadd.f32 %v2492, %v2620
        %v2622 = vpop.f32.mrf.mxu0
        %2623 = vmatprep.mubr.f32.mxu0 0.0
        %2624 = vmatmul.mubr.f32.gmra.mxu0 %v2522
        %v2625 = vpop.f32.mrf.mxu0
        %v2626 = vadd.f32 %v2497, %v2625
        %v2627 = vpop.f32.mrf.mxu0
        %2628 = vdwg.mxu0
        %v2629 = vld [vmem:[%s11] sm:$0x1]
        %v2631 = vlaneseq
        %v2632 = vshrl.u32 %v2631, 7
        %v2633 = vsub.s32 0, %v2632
        %v2634 = vrot.slane %v2629, %v2633
        %v2636 = vadd.f32 %v2591, %v2634
        %v2637 = vadd.f32 %v2596, %v2634
        %v2638 = vadd.f32 %v2601, %v2634
        %v2639 = vadd.f32 %v2606, %v2634
        %v2640 = vadd.f32 %v2611, %v2634
        %v2641 = vadd.f32 %v2616, %v2634
        %v2642 = vadd.f32 %v2621, %v2634
        %v2643 = vadd.f32 %v2626, %v2634
        %v2644 = vadd.f32 %v2636, %v412
        %v2645 = vadd.f32 %v2637, %v413
        %v2646 = vadd.f32 %v2638, %v414
        %v2647 = vadd.f32 %v2639, %v415
        %v2648 = vadd.f32 %v2640, %v416
        %v2649 = vadd.f32 %v2641, %v417
        %v2650 = vadd.f32 %v2642, %v418
        %v2651 = vadd.f32 %v2643, %v419
        %2652 = vst.msk [vmem:[%s406] sm:$0xff] %vm428, %v2644
        %2653 = vst.msk [vmem:[%s406 + $0x8] sm:$0xff] %vm428, %v2645
        %2654 = vst.msk [vmem:[%s406 + $0x10] sm:$0xff] %vm428, %v2646
        %2655 = vst.msk [vmem:[%s406 + $0x18] sm:$0xff] %vm428, %v2647
        %2656 = vst.msk [vmem:[%s406 + $0x20] sm:$0xff] %vm428, %v2648
        %2657 = vst.msk [vmem:[%s406 + $0x28] sm:$0xff] %vm428, %v2649
        %2658 = vst.msk [vmem:[%s406 + $0x30] sm:$0xff] %vm428, %v2650
        %2659 = vst.msk [vmem:[%s406 + $0x38] sm:$0xff] %vm428, %v2651
        %s2660 = sand.u32 %s291, 1
        %s2661 = scalar_lea.sflag [#allocation3], %s2660
        %s2662 = sand.u32 %s291, 1
        %s2663 = smul.addr %s2662, 64
        %s2664 = scalar_lea.vmem [#allocation2], %s2663
        // Predicated region
        $region69: #{tpu_custom_call.1} parent=67 // pred_check
          %p2665 = pneg %p301
        $region70: #{tpu_custom_call.1} parent=67 // pred_check_branch
          %2667 = sbr.rel (%p2665) target = $region72
        $region71: #{tpu_custom_call.1} parent=67 // pred_region
          %s2669 = ssub.s32 1024, 1024
          %2670 = vsyncadd %s2661, %s2669
          %s2671 = smul.addr %s26, 8
          %s2672 = smul.addr %s2671, 128
          %s2673 = scalar_lea.hbm %s12, %s2672
          %s2674 = sshll.u32 %s2664, 4
          %s2675 = int_to_ptr.vmem [resolvable:$true] %s2674
          %2680 = dma.vmem_to_hbm [thread:$0]  %s2675, 1024, %s2673, %s2661, 128, 128, 8
        $region72: #{tpu_custom_call.1} parent=67 // pred_fallthru
          _
      $region68: #{tpu_custom_call.1} parent=5 // pred_fallthru
        _
      %p2681 = scmp.le.s32.totalorder 2, %s21
      // Predicated region
      $region73: #{tpu_custom_call.1} parent=5 // pred_check
        %p2682 = pneg %p2681
      $region74: #{tpu_custom_call.1} parent=5 // pred_check_branch
        %2684 = sbr.rel (%p2682) target = $region76
      $region75: #{tpu_custom_call.1} parent=5 // pred_region
        %s2685 = ssub.s32 %s21, 2
        // Predicated region
        $region77: #{tpu_custom_call.1} parent=75 // pred_check
          %p2686 = pneg %p307
        $region78: #{tpu_custom_call.1} parent=75 // pred_check_branch
          %2688 = sbr.rel (%p2686) target = $region80
        $region79: #{tpu_custom_call.1} parent=75 // pred_region
          %s2689 = sand.u32 %s292, 1
          %s2690 = scalar_lea.sflag [#allocation3], %s2689
          %s2691 = sand.u32 %s292, 1
          %s2692 = smul.addr %s2691, 64
          %s2693 = scalar_lea.vmem [#allocation2], %s2692
          %2694 = dma.done %s2690, 1024
        $region80: #{tpu_custom_call.1} parent=75 // pred_fallthru
          _
      $region76: #{tpu_custom_call.1} parent=5 // pred_fallthru
        _
    $region6: #{tpu_custom_call.1} parent=1 // loop_footer
      %s25 = sadd.s32 1, %s21
    $region7: #{tpu_custom_call.1} parent=1 // loop_footer_branch
      %20 = sbr.rel target = $region3
    $region8: #{tpu_custom_call.1} parent=1 // loop_exit
      _
    %2695 = vsyncpa [#allocation3], 1
    %s2696 = scalar_lea.sflag [#allocation3], 1
    %2697 = vsyncpa %s2696, 1

</llo_original>
